<compile_context>
chip_gen: v6e
topology: v6e:2x2x1
jax: 0.10.0
libtpu: 0.0.40
codegen_flags: <defaults>
</compile_context>

<pallas_src>
import functools

import jax
import jax.numpy as jnp
from jax import lax
from jax.experimental import pallas as pl
from jax.experimental.pallas import tpu as pltpu

EPS = 1e-5
KH = KW = 3
STRIDE = 2
PAD = 1
GROUPS = 8


def _conv_stats_kernel(xe_ref, xo_ref, w_ref, y_ref, stats_ref, *, ow):
    """One grid step = one (image, row-tile): conv for TOH output rows + partial BN stats.

    xe_ref:    ((OH+1)*OW, 3*Cin)  kw-interleaved EVEN padded rows (whole image, compute dtype)
    xo_ref:    (OH*OW,     3*Cin)  kw-interleaved ODD  padded rows (whole image, compute dtype)
    w_ref:     (KH, 3*Cin, Cout)   per-kh block-diagonal weights (VMEM resident)
    y_ref:     (TOH*OW, Cout)      un-normalized conv output tile
    stats_ref: (2, Cout)           per-tile [sum, sum_of_squares] (float32)
    """
    tm, _ = y_ref.shape
    m0 = pl.program_id(1) * tm
    if tm % 8 == 0:
        m0 = pl.multiple_of(m0, 8)

    # Output row oh, tap kh uses padded row 2*oh + kh:
    #   kh=0 -> even view row oh ; kh=1 -> odd view row oh ; kh=2 -> even view row oh+1.
    # Flattened (row*OW + ow) indexing makes each tap ONE contiguous multi-row load.
    a0 = xe_ref[pl.ds(m0, tm), :]
    a1 = xo_ref[pl.ds(m0, tm), :]
    a2 = xe_ref[pl.ds(m0 + ow, tm), :]

    acc = jnp.dot(a0, w_ref[0], preferred_element_type=jnp.float32)
    acc = acc + jnp.dot(a1, w_ref[1], preferred_element_type=jnp.float32)
    acc = acc + jnp.dot(a2, w_ref[2], preferred_element_type=jnp.float32)

    y_ref[...] = acc.astype(y_ref.dtype)
    # Partial BN statistics from the same in-register f32 tile (single traversal, 2 XLU
    # reductions per tile instead of 2 per row).
    # TODO(synk): E[x^2]-E[x]^2 in f32 can cancel badly if conv outputs have a large mean
    # relative to their std; switch to mean-centred per-tile partials (Chan combine) if needed.
    ssum = jnp.sum(acc, axis=0, keepdims=True)
    ssq = jnp.sum(acc * acc, axis=0, keepdims=True)
    stats_ref[...] = jnp.concatenate([ssum, ssq], axis=0)


def _bn_apply_kernel(y_ref, scale_ref, shift_ref, o_ref):
    """Mem-bound normalize of one lane-dense (TM, Cout) block: out = y*scale + shift (f32)."""
    y = y_ref[...].astype(jnp.float32)
    o_ref[...] = (y * scale_ref[...] + shift_ref[...]).astype(o_ref.dtype)


def prepare_grouped_weight(weight, groups=GROUPS):
    """PyTorch grouped OIHW weight [Cout, Cin//groups, 3, 3] ->
    per-kh block-diagonal, kw-interleaved matrices [KH, KW*Cin, Cout].
    Static per module: call once outside the hot path."""
    cout, cin_g, kh, kw = weight.shape
    cpg = cout // groups
    cin = cin_g * groups
    wg = weight.reshape(groups, cpg, cin_g, kh, kw)
    eye = jnp.eye(groups, dtype=weight.dtype)
    # w_bd[go, gi, o, i, kh, kw] = weight[go*cpg + o, i, kh, kw] if go == gi else 0
    w_bd = wg[:, None, :, :, :, :] * eye[:, :, None, None, None, None]
    # -> (kh, kw, gi, i, go, o) -> (KH, KW*Cin, Cout); K index = kw*Cin + (gi*cin_g + i)
    return jnp.transpose(w_bd, (4, 5, 1, 3, 0, 2)).reshape(kh, kw * cin, cout)


def _pick_row_tile(oh, ow, n, target_m=1024):
    """Largest divisor TOH of OH with M = TOH*OW <= target_m and a layout-legal block
    (M multiple of 8, or the full extent).  Prefer >= 2 row tiles when N == 1 so both
    TensorCores get work on megacore parts."""
    cands = []
    for d in range(oh, 0, -1):
        if oh % d:
            continue
        tm = d * ow
        if tm > target_m and d != 1:
            continue
        if tm % 8 and d != oh:
            continue
        cands.append(d)
    if not cands:
        return oh
    toh = cands[0]
    if n == 1 and oh // toh < 2:
        for d in cands:
            if oh // d >= 2:
                return d
    return toh


def _pick_bn_rows(total, cap=1024):
    """Largest divisor of `total` that is <= cap and a multiple of 8 (or the full extent)."""
    if total <= cap:
        return total
    for d in range(cap, 7, -1):
        if total % d == 0 and d % 8 == 0:
            return d
    return total


def _vmem_limit(resident_bytes):
    """Explicit VMEM budget: double-buffered blocks + headroom, clamped below v7x's 64 MiB."""
    want = int(2 * resident_bytes * 1.25) + (4 << 20)
    return max(32 << 20, min(64 << 20, want))


@functools.partial(jax.jit, static_argnames=("compute_dtype",))
def conv_bn(x_nchw, w_taps, gamma, beta, *, compute_dtype=jnp.bfloat16):
    """Forward of Conv2d(128,128,3,stride=2,pad=1,groups=8,bias=False) + BatchNorm2d(128)
    with training-mode batch statistics.

    x_nchw: [N, Cin, H, W] float32; w_taps: output of prepare_grouped_weight (static per module).
    """
    n, c, h, w = x_nchw.shape
    _, k3cin, cout = w_taps.shape
    cin = k3cin // KW
    oh = (h + 2 * PAD - KH) // STRIDE + 1
    ow = (w + 2 * PAD - KW) // STRIDE + 1

    # ---- wrapper-side layout prep (kept to a single interleaved array so the transpose /
    #      cast / pad / parity-slice chain can fuse into one ~input-sized HBM pass) ----
    x = jnp.transpose(x_nchw, (0, 2, 3, 1)).astype(compute_dtype)          # NHWC, matmul dtype
    xp = jnp.pad(x, ((0, 0), (PAD, PAD), (PAD, PAD), (0, 0)))
    cols = jnp.concatenate(
        [xp[:, :, k::STRIDE, :][:, :, :ow, :] for k in range(KW)], axis=-1
    )  # (N, Hp, OW, KW*Cin): cols[n, hh, ow, kw*Cin + c] = xp[n, hh, 2*ow + kw, c]
    xe = cols[:, 0::STRIDE][:, : oh + 1].reshape(n, (oh + 1) * ow, KW * cin)
    xo = cols[:, 1::STRIDE][:, :oh].reshape(n, oh * ow, KW * cin)
    w_k = w_taps.astype(compute_dtype)

    toh = _pick_row_tile(oh, ow, n)
    t = oh // toh
    tm = toh * ow
    y_dtype = compute_dtype  # bf16 intermediate halves y's HBM write+read traffic (stats stay f32)

    itm = jnp.dtype(compute_dtype).itemsize
    resident1 = ((oh + 1) * ow * KW * cin * itm          # xe block (whole image)
                 + oh * ow * KW * cin * itm              # xo block (whole image)
                 + KH * KW * cin * cout * itm            # weights (VMEM resident)
                 + tm * cout * jnp.dtype(y_dtype).itemsize
                 + 2 * cout * 4)
    cparams1 = pltpu.CompilerParams(
        dimension_semantics=("parallel", "parallel"),
        vmem_limit_bytes=_vmem_limit(resident1),
    )

    # Whole-image input blocks: index_map depends only on the batch index i, and i is the
    # OUTER grid axis, so each image is DMA'd once and reused across every row tile j.
    xe_spec = pl.BlockSpec((None, (oh + 1) * ow, KW * cin), lambda i, j: (i, 0, 0))
    xo_spec = pl.BlockSpec((None, oh * ow, KW * cin), lambda i, j: (i, 0, 0))
    w_spec = pl.BlockSpec((KH, KW * cin, cout), lambda i, j: (0, 0, 0))     # VMEM resident
    y_spec = pl.BlockSpec((None, tm, cout), lambda i, j: (i, j, 0))

    # Pass 1: implicit-GEMM conv (3 MXU matmuls per tile, M=TOH*OW, K=KW*Cin) + partial stats.
    y, partial_stats = pl.pallas_call(
        functools.partial(_conv_stats_kernel, ow=ow),
        grid=(n, t),
        in_specs=[xe_spec, xo_spec, w_spec],
        out_specs=(
            y_spec,
            pl.BlockSpec((None, None, 2, cout), lambda i, j: (i, j, 0, 0)),
        ),
        out_shape=(
            jax.ShapeDtypeStruct((n, oh * ow, cout), y_dtype),
            jax.ShapeDtypeStruct((n, t, 2, cout), jnp.float32),
        ),
        compiler_params=cparams1,
    )(xe, xo, w_k)

    # Tiny global reduction + BN scale/shift computed ONCE in XLA (not per grid step).
    sums = jnp.sum(partial_stats, axis=(0, 1))                   # (2, Cout)
    inv_count = 1.0 / float(n * oh * ow)
    mean = sums[0] * inv_count
    var = sums[1] * inv_count - mean * mean                      # biased variance (PyTorch BN)
    inv = lax.rsqrt(var + EPS)
    g32 = gamma.astype(jnp.float32)
    scale = (g32 * inv).reshape(1, cout)
    shift = (beta.astype(jnp.float32) - mean * g32 * inv).reshape(1, cout)

    # Pass 2: mem-bound normalize over the flattened (N*OH*OW, Cout) view, big lane-dense blocks.
    m2 = n * oh * ow
    tm2 = _pick_bn_rows(m2)
    resident2 = tm2 * cout * (jnp.dtype(y_dtype).itemsize + 4) + 2 * cout * 4
    cparams2 = pltpu.CompilerParams(
        dimension_semantics=("parallel",),
        vmem_limit_bytes=_vmem_limit(resident2),
    )
    out_flat = pl.pallas_call(
        _bn_apply_kernel,
        grid=(m2 // tm2,),
        in_specs=[
            pl.BlockSpec((tm2, cout), lambda i: (i, 0)),
            pl.BlockSpec((1, cout), lambda i: (0, 0)),
            pl.BlockSpec((1, cout), lambda i: (0, 0)),
        ],
        out_specs=pl.BlockSpec((tm2, cout), lambda i: (i, 0)),
        out_shape=jax.ShapeDtypeStruct((m2, cout), jnp.float32),
        compiler_params=cparams2,
    )(y.reshape(m2, cout), scale, shift)

    # NHWC -> NCHW to match the PyTorch module's output layout.
    return jnp.transpose(out_flat.reshape(n, oh, ow, cout), (0, 3, 1, 2))


def reference(x, weight, gamma, beta):
    y = lax.conv_general_dilated(
        x, weight,
        window_strides=(STRIDE, STRIDE),
        padding=((PAD, PAD), (PAD, PAD)),
        dimension_numbers=("NCHW", "OIHW", "NCHW"),
        feature_group_count=GROUPS,
    )
    mean = y.mean(axis=(0, 2, 3), keepdims=True)
    var = y.var(axis=(0, 2, 3), keepdims=True)
    return (y - mean) / jnp.sqrt(var + EPS) * gamma.reshape(1, -1, 1, 1) + beta.reshape(
        1, -1, 1, 1
    )


if __name__ == "__main__":
    # Channel count (128) and conv geometry are fixed by the module; batch/spatial kept small.
    key = jax.random.PRNGKey(0)
    kx, kw_, kg, kb = jax.random.split(key, 4)
    x = jax.random.normal(kx, (2, 128, 16, 16), jnp.float32)
    weight = 0.1 * jax.random.normal(kw_, (128, 128 // GROUPS, 3, 3), jnp.float32)
    gamma = 1.0 + 0.1 * jax.random.normal(kg, (128,), jnp.float32)
    beta = 0.1 * jax.random.normal(kb, (128,), jnp.float32)

    # Static per module: expand the grouped weight to per-kh block-diagonal matrices once.
    w_taps = jax.block_until_ready(prepare_grouped_weight(weight))

    ref = jax.block_until_ready(reference(x, weight, gamma, beta))

    # f32 matmul + f32 intermediate path: tight tolerance (validates structure / BN semantics).
    out_f32 = jax.block_until_ready(conv_bn(x, w_taps, gamma, beta, compute_dtype=jnp.float32))
    if not jnp.allclose(out_f32, ref, atol=2e-3, rtol=2e-3):
        raise AssertionError("Pallas kernel (f32) output mismatch vs JAX reference")

    # Default bf16-MXU path: bf16 operands + bf16 intermediate, f32 accumulation/BN math.
    out_bf16 = jax.block_until_ready(conv_bn(x, w_taps, gamma, beta))
    if not jnp.allclose(out_bf16, ref, atol=6e-2, rtol=6e-2):
        raise AssertionError("Pallas kernel (bf16) output mismatch vs JAX reference")

    print("KERNEL_OK")
</pallas_src>

<mosaic_0001>
module attributes {stable_mosaic.version = 11 : i64} {
  func.func @_conv_stats_kernel(%arg0: i32, %arg1: i32, %arg2: memref<1x72x384xf32, #tpu.memory_space<vmem>>, %arg3: memref<1x64x384xf32, #tpu.memory_space<vmem>>, %arg4: memref<3x384x128xf32, #tpu.memory_space<vmem>>, %arg5: memref<1x64x128xf32, #tpu.memory_space<vmem>>, %arg6: memref<1x1x2x128xf32, #tpu.memory_space<vmem>>) attributes {dimension_semantics = [#tpu.dimension_semantics<parallel>, #tpu.dimension_semantics<parallel>], iteration_bounds = array<i64: 2, 1>, scalar_prefetch = 0 : i64, scratch_operands = 0 : i64, tpu.core_type = #tpu.core_type<tc>, window_params = [{transform_indices = @transform_0, window_bounds = array<i64: 1, 72, 384>}, {transform_indices = @transform_1, window_bounds = array<i64: 1, 64, 384>}, {pipeline_mode = #tpu.pipeline_mode<synchronous>, transform_indices = @transform_2, window_bounds = array<i64: 3, 384, 128>}, {transform_indices = @transform_3, window_bounds = array<i64: 1, 64, 128>}, {transform_indices = @transform_4, window_bounds = array<i64: 1, 1, 2, 128>}]} {
    %c64_i32 = arith.constant 64 : i32
    %0 = arith.muli %arg1, %c64_i32 : i32
    %1 = tpu.assume_multiple %0, 8 : i32
    %c0 = arith.constant 0 : index
    %2 = arith.index_cast %1 : i32 to index
    %c0_0 = arith.constant 0 : index
    %3 = vector.load %arg2[%c0, %2, %c0_0] : memref<1x72x384xf32, #tpu.memory_space<vmem>>, vector<1x64x384xf32>
    %4 = vector.shape_cast %3 : vector<1x64x384xf32> to vector<64x384xf32>
    %c0_1 = arith.constant 0 : index
    %5 = arith.index_cast %1 : i32 to index
    %c0_2 = arith.constant 0 : index
    %6 = vector.load %arg3[%c0_1, %5, %c0_2] : memref<1x64x384xf32, #tpu.memory_space<vmem>>, vector<1x64x384xf32>
    %7 = vector.shape_cast %6 : vector<1x64x384xf32> to vector<64x384xf32>
    %c8_i32 = arith.constant 8 : i32
    %8 = arith.addi %1, %c8_i32 : i32
    %c0_3 = arith.constant 0 : index
    %9 = arith.index_cast %8 : i32 to index
    %c0_4 = arith.constant 0 : index
    %10 = vector.load %arg2[%c0_3, %9, %c0_4] : memref<1x72x384xf32, #tpu.memory_space<vmem>>, vector<1x64x384xf32>
    %11 = vector.shape_cast %10 : vector<1x64x384xf32> to vector<64x384xf32>
    %c0_5 = arith.constant 0 : index
    %c0_6 = arith.constant 0 : index
    %c0_7 = arith.constant 0 : index
    %12 = vector.load %arg4[%c0_5, %c0_6, %c0_7] : memref<3x384x128xf32, #tpu.memory_space<vmem>>, vector<1x384x128xf32>
    %13 = vector.shape_cast %12 : vector<1x384x128xf32> to vector<384x128xf32>
    %cst = arith.constant dense<0.000000e+00> : vector<64x128xf32>
    %14 = tpu.matmul %4, %13, %cst {dimension_numbers = #tpu.dot_dimension_numbers<[1], [0], [0], [1], [0, 0, 1, 1], [], []>} : vector<64x384xf32>, vector<384x128xf32>, vector<64x128xf32> -> vector<64x128xf32>
    %c1 = arith.constant 1 : index
    %c0_8 = arith.constant 0 : index
    %c0_9 = arith.constant 0 : index
    %15 = vector.load %arg4[%c1, %c0_8, %c0_9] : memref<3x384x128xf32, #tpu.memory_space<vmem>>, vector<1x384x128xf32>
    %16 = vector.shape_cast %15 : vector<1x384x128xf32> to vector<384x128xf32>
    %cst_10 = arith.constant dense<0.000000e+00> : vector<64x128xf32>
    %17 = tpu.matmul %7, %16, %cst_10 {dimension_numbers = #tpu.dot_dimension_numbers<[1], [0], [0], [1], [0, 0, 1, 1], [], []>} : vector<64x384xf32>, vector<384x128xf32>, vector<64x128xf32> -> vector<64x128xf32>
    %18 = arith.addf %14, %17 : vector<64x128xf32>
    %c2 = arith.constant 2 : index
    %c0_11 = arith.constant 0 : index
    %c0_12 = arith.constant 0 : index
    %19 = vector.load %arg4[%c2, %c0_11, %c0_12] : memref<3x384x128xf32, #tpu.memory_space<vmem>>, vector<1x384x128xf32>
    %20 = vector.shape_cast %19 : vector<1x384x128xf32> to vector<384x128xf32>
    %cst_13 = arith.constant dense<0.000000e+00> : vector<64x128xf32>
    %21 = tpu.matmul %11, %20, %cst_13 {dimension_numbers = #tpu.dot_dimension_numbers<[1], [0], [0], [1], [0, 0, 1, 1], [], []>} : vector<64x384xf32>, vector<384x128xf32>, vector<64x128xf32> -> vector<64x128xf32>
    %22 = arith.addf %18, %21 : vector<64x128xf32>
    %c0_14 = arith.constant 0 : index
    %c0_15 = arith.constant 0 : index
    %c0_16 = arith.constant 0 : index
    %23 = vector.load %arg5[%c0_14, %c0_15, %c0_16] : memref<1x64x128xf32, #tpu.memory_space<vmem>>, vector<1x64x128xf32>
    %24 = vector.shape_cast %23 : vector<1x64x128xf32> to vector<64x128xf32>
    %25 = vector.shape_cast %22 : vector<64x128xf32> to vector<1x64x128xf32>
    tpu.vector_store %arg5[%c0_14, %c0_15, %c0_16], %25 {strides = array<i32>} : memref<1x64x128xf32, #tpu.memory_space<vmem>>, vector<1x64x128xf32>,
    %cst_17 = arith.constant dense<0.000000e+00> : vector<128xf32>
    %26 = vector.multi_reduction <add>, %22, %cst_17 [0] : vector<64x128xf32> to vector<128xf32>
    %27 = vector.shape_cast %26 : vector<128xf32> to vector<1x128xf32>
    %28 = arith.mulf %22, %22 : vector<64x128xf32>
    %cst_18 = arith.constant dense<0.000000e+00> : vector<128xf32>
    %29 = vector.multi_reduction <add>, %28, %cst_18 [0] : vector<64x128xf32> to vector<128xf32>
    %30 = vector.shape_cast %29 : vector<128xf32> to vector<1x128xf32>
    %31 = tpu.concatenate %27, %30 in 0 : vector<1x128xf32>, vector<1x128xf32> -> vector<2x128xf32>
    %c0_19 = arith.constant 0 : index
    %c0_20 = arith.constant 0 : index
    %c0_21 = arith.constant 0 : index
    %c0_22 = arith.constant 0 : index
    %32 = vector.load %arg6[%c0_19, %c0_20, %c0_21, %c0_22] : memref<1x1x2x128xf32, #tpu.memory_space<vmem>>, vector<1x1x2x128xf32>
    %33 = vector.shape_cast %32 : vector<1x1x2x128xf32> to vector<2x128xf32>
    %34 = vector.shape_cast %31 : vector<2x128xf32> to vector<1x1x2x128xf32>
    tpu.vector_store %arg6[%c0_19, %c0_20, %c0_21, %c0_22], %34 {strides = array<i32>} : memref<1x1x2x128xf32, #tpu.memory_space<vmem>>, vector<1x1x2x128xf32>,
    return
  }
  func.func @transform_0(%arg0: i32, %arg1: i32) -> (i32, i32, i32) {
    %c0_i32 = arith.constant 0 : i32
    %c0_i32_0 = arith.constant 0 : i32
    %c0_i32_1 = arith.constant 0 : i32
    return %arg0, %c0_i32, %c0_i32_0 : i32, i32, i32
  }
  func.func @transform_1(%arg0: i32, %arg1: i32) -> (i32, i32, i32) {
    %c0_i32 = arith.constant 0 : i32
    %c0_i32_0 = arith.constant 0 : i32
    %c0_i32_1 = arith.constant 0 : i32
    return %arg0, %c0_i32, %c0_i32_0 : i32, i32, i32
  }
  func.func @transform_2(%arg0: i32, %arg1: i32) -> (i32, i32, i32) {
    %c0_i32 = arith.constant 0 : i32
    %c0_i32_0 = arith.constant 0 : i32
    %c0_i32_1 = arith.constant 0 : i32
    %c0_i32_2 = arith.constant 0 : i32
    return %c0_i32, %c0_i32_0, %c0_i32_1 : i32, i32, i32
  }
  func.func @transform_3(%arg0: i32, %arg1: i32) -> (i32, i32, i32) {
    %c0_i32 = arith.constant 0 : i32
    %c0_i32_0 = arith.constant 0 : i32
    return %arg0, %arg1, %c0_i32 : i32, i32, i32
  }
  func.func @transform_4(%arg0: i32, %arg1: i32) -> (i32, i32, i32, i32) {
    %c0_i32 = arith.constant 0 : i32
    %c0_i32_0 = arith.constant 0 : i32
    %c0_i32_1 = arith.constant 0 : i32
    return %arg0, %arg1, %c0_i32, %c0_i32_0 : i32, i32, i32, i32
  }
}

module attributes {stable_mosaic.version = 11 : i64} {
  func.func @_bn_apply_kernel(%arg0: i32, %arg1: memref<128x128xf32, #tpu.memory_space<vmem>>, %arg2: memref<1x128xf32, #tpu.memory_space<vmem>>, %arg3: memref<1x128xf32, #tpu.memory_space<vmem>>, %arg4: memref<128x128xf32, #tpu.memory_space<vmem>>) attributes {dimension_semantics = [#tpu.dimension_semantics<parallel>], iteration_bounds = array<i64: 1>, scalar_prefetch = 0 : i64, scratch_operands = 0 : i64, tpu.core_type = #tpu.core_type<tc>, window_params = [{transform_indices = @transform_0, window_bounds = array<i64: 128, 128>}, {pipeline_mode = #tpu.pipeline_mode<synchronous>, transform_indices = @transform_1, window_bounds = array<i64: 1, 128>}, {pipeline_mode = #tpu.pipeline_mode<synchronous>, transform_indices = @transform_2, window_bounds = array<i64: 1, 128>}, {transform_indices = @transform_3, window_bounds = array<i64: 128, 128>}]} {
    %c0 = arith.constant 0 : index
    %c0_0 = arith.constant 0 : index
    %0 = vector.load %arg1[%c0, %c0_0] : memref<128x128xf32, #tpu.memory_space<vmem>>, vector<128x128xf32>
    %c0_1 = arith.constant 0 : index
    %c0_2 = arith.constant 0 : index
    %1 = vector.load %arg2[%c0_1, %c0_2] : memref<1x128xf32, #tpu.memory_space<vmem>>, vector<1x128xf32>
    %2 = vector.broadcast %1 : vector<1x128xf32> to vector<128x128xf32>
    %3 = arith.mulf %0, %2 : vector<128x128xf32>
    %c0_3 = arith.constant 0 : index
    %c0_4 = arith.constant 0 : index
    %4 = vector.load %arg3[%c0_3, %c0_4] : memref<1x128xf32, #tpu.memory_space<vmem>>, vector<1x128xf32>
    %5 = vector.broadcast %4 : vector<1x128xf32> to vector<128x128xf32>
    %6 = arith.addf %3, %5 : vector<128x128xf32>
    %c0_5 = arith.constant 0 : index
    %c0_6 = arith.constant 0 : index
    %7 = vector.load %arg4[%c0_5, %c0_6] : memref<128x128xf32, #tpu.memory_space<vmem>>, vector<128x128xf32>
    tpu.vector_store %arg4[%c0_5, %c0_6], %6 {strides = array<i32>} : memref<128x128xf32, #tpu.memory_space<vmem>>, vector<128x128xf32>,
    return
  }
  func.func @transform_0(%arg0: i32) -> (i32, i32) {
    %c0_i32 = arith.constant 0 : i32
    %c0_i32_0 = arith.constant 0 : i32
    return %arg0, %c0_i32 : i32, i32
  }
  func.func @transform_1(%arg0: i32) -> (i32, i32) {
    %c0_i32 = arith.constant 0 : i32
    %c0_i32_0 = arith.constant 0 : i32
    %c0_i32_1 = arith.constant 0 : i32
    return %c0_i32, %c0_i32_0 : i32, i32
  }
  func.func @transform_2(%arg0: i32) -> (i32, i32) {
    %c0_i32 = arith.constant 0 : i32
    %c0_i32_0 = arith.constant 0 : i32
    %c0_i32_1 = arith.constant 0 : i32
    return %c0_i32, %c0_i32_0 : i32, i32
  }
  func.func @transform_3(%arg0: i32) -> (i32, i32) {
    %c0_i32 = arith.constant 0 : i32
    %c0_i32_0 = arith.constant 0 : i32
    return %arg0, %c0_i32 : i32, i32
  }
}

</mosaic_0001>

<llo_original>
// kernel: conv_bn.3
$region0: #{conv_bn.3}
  #allocation0 [shape = 'u32[]', space=smem, size = 0x4, offset = 0x4, fixed_abs, tag = 'smem constant byte address 0x4 - core index']
  #allocation1 [shape = 'u32[144,128]{1,0:T(1,128)}', space=vmem, size = 0x12000, scoped, tag = 'internal scratch']
  %s0 = inlined_call_operand.vmem [shape: f32[128,128], index: 0, kind: input, shape index: {}]
  %s1 = inlined_call_operand.vmem [shape: f32[1,128], index: 1, kind: input, shape index: {}]
  %s2 = inlined_call_operand.vmem [shape: f32[1,128], index: 2, kind: input, shape index: {}]
  %s3 = inlined_call_operand.hbm [shape: f32[128,128], index: 3, kind: output, shape index: {}]
  %s4 = sld [smem:[#allocation0]]
  $region22: #{conv_bn.3} parent=0
    _
  %s6 = ssub.s32 1, %s4
  %s7 = scalar_select 0, %s6, %s4
  $region1: #{conv_bn.3} parent=0
    #allocation2 [shape = 'u8[65536]{0}', space=vmem, size = 0x10000, scoped, tag = 'output window, operand 0, single buffered']
    #allocation3 [shape = 's32[1]{0}', space=sflag, size = 0x4, scoped, tag = 'scoped memory for conv_bn.3']
    %8 = vsyncpa [#allocation3], 0
    // Predicated region
    $region2: #{conv_bn.3} parent=1 // pred_check
      _
    $region3: #{conv_bn.3} parent=1 // pred_check_branch
      %10 = sbr.rel (0) target = $region5
    $region4: #{conv_bn.3} parent=1 // pred_region
      _
    $region5: #{conv_bn.3} parent=1 // pred_fallthru
      _
    // Predicated region
    $region6: #{conv_bn.3} parent=1 // pred_check
      _
    $region7: #{conv_bn.3} parent=1 // pred_check_branch
      %12 = sbr.rel (0) target = $region9
    $region8: #{conv_bn.3} parent=1 // pred_region
      _
    $region9: #{conv_bn.3} parent=1 // pred_fallthru
      _
    // Predicated region
    $region10: #{conv_bn.3} parent=1 // pred_check
      _
    $region11: #{conv_bn.3} parent=1 // pred_check_branch
      %14 = sbr.rel (0) target = $region13
    $region12: #{conv_bn.3} parent=1 // pred_region
      _
    $region13: #{conv_bn.3} parent=1 // pred_fallthru
      _
    %v15 = vld [vmem:[%s0] sm:$0xff]
    %v16 = vld [vmem:[%s0 + $0x8] sm:$0xff]
    %v17 = vld [vmem:[%s0 + $0x10] sm:$0xff]
    %v18 = vld [vmem:[%s0 + $0x18] sm:$0xff]
    %v19 = vld [vmem:[%s0 + $0x20] sm:$0xff]
    %v20 = vld [vmem:[%s0 + $0x28] sm:$0xff]
    %v21 = vld [vmem:[%s0 + $0x30] sm:$0xff]
    %v22 = vld [vmem:[%s0 + $0x38] sm:$0xff]
    %v23 = vld [vmem:[%s0 + $0x40] sm:$0xff]
    %v24 = vld [vmem:[%s0 + $0x48] sm:$0xff]
    %v25 = vld [vmem:[%s0 + $0x50] sm:$0xff]
    %v26 = vld [vmem:[%s0 + $0x58] sm:$0xff]
    %v27 = vld [vmem:[%s0 + $0x60] sm:$0xff]
    %v28 = vld [vmem:[%s0 + $0x68] sm:$0xff]
    %v29 = vld [vmem:[%s0 + $0x70] sm:$0xff]
    %v30 = vld [vmem:[%s0 + $0x78] sm:$0xff]
    %v31 = vld [vmem:[%s1] sm:$0x1]
    %v33 = vlaneseq
    %v34 = vshrl.u32 %v33, 7
    %v35 = vsub.s32 0, %v34
    %v36 = vrot.slane %v31, %v35
    %v38 = vmul.f32 %v15, %v36
    %v39 = vmul.f32 %v16, %v36
    %v40 = vmul.f32 %v17, %v36
    %v41 = vmul.f32 %v18, %v36
    %v42 = vmul.f32 %v19, %v36
    %v43 = vmul.f32 %v20, %v36
    %v44 = vmul.f32 %v21, %v36
    %v45 = vmul.f32 %v22, %v36
    %v46 = vmul.f32 %v23, %v36
    %v47 = vmul.f32 %v24, %v36
    %v48 = vmul.f32 %v25, %v36
    %v49 = vmul.f32 %v26, %v36
    %v50 = vmul.f32 %v27, %v36
    %v51 = vmul.f32 %v28, %v36
    %v52 = vmul.f32 %v29, %v36
    %v53 = vmul.f32 %v30, %v36
    %v54 = vld [vmem:[%s2] sm:$0x1]
    %v56 = vlaneseq
    %v57 = vshrl.u32 %v56, 7
    %v58 = vsub.s32 0, %v57
    %v59 = vrot.slane %v54, %v58
    %v61 = vadd.f32 %v38, %v59
    %v62 = vadd.f32 %v39, %v59
    %v63 = vadd.f32 %v40, %v59
    %v64 = vadd.f32 %v41, %v59
    %v65 = vadd.f32 %v42, %v59
    %v66 = vadd.f32 %v43, %v59
    %v67 = vadd.f32 %v44, %v59
    %v68 = vadd.f32 %v45, %v59
    %v69 = vadd.f32 %v46, %v59
    %v70 = vadd.f32 %v47, %v59
    %v71 = vadd.f32 %v48, %v59
    %v72 = vadd.f32 %v49, %v59
    %v73 = vadd.f32 %v50, %v59
    %v74 = vadd.f32 %v51, %v59
    %v75 = vadd.f32 %v52, %v59
    %v76 = vadd.f32 %v53, %v59
    %77 = vst [vmem:[#allocation2] sm:$0xff] %v61
    %78 = vst [vmem:[#allocation2 + $0x8] sm:$0xff] %v62
    %79 = vst [vmem:[#allocation2 + $0x10] sm:$0xff] %v63
    %80 = vst [vmem:[#allocation2 + $0x18] sm:$0xff] %v64
    %81 = vst [vmem:[#allocation2 + $0x20] sm:$0xff] %v65
    %82 = vst [vmem:[#allocation2 + $0x28] sm:$0xff] %v66
    %83 = vst [vmem:[#allocation2 + $0x30] sm:$0xff] %v67
    %84 = vst [vmem:[#allocation2 + $0x38] sm:$0xff] %v68
    %85 = vst [vmem:[#allocation2 + $0x40] sm:$0xff] %v69
    %86 = vst [vmem:[#allocation2 + $0x48] sm:$0xff] %v70
    %87 = vst [vmem:[#allocation2 + $0x50] sm:$0xff] %v71
    %88 = vst [vmem:[#allocation2 + $0x58] sm:$0xff] %v72
    %89 = vst [vmem:[#allocation2 + $0x60] sm:$0xff] %v73
    %90 = vst [vmem:[#allocation2 + $0x68] sm:$0xff] %v74
    %91 = vst [vmem:[#allocation2 + $0x70] sm:$0xff] %v75
    %92 = vst [vmem:[#allocation2 + $0x78] sm:$0xff] %v76
    // Predicated region
    $region14: #{conv_bn.3} parent=1 // pred_check
      _
    $region15: #{conv_bn.3} parent=1 // pred_check_branch
      %94 = sbr.rel (0) target = $region17
    $region16: #{conv_bn.3} parent=1 // pred_region
      %s96 = ssub.s32 2048, 2048
      %97 = vsyncadd [#allocation3], %s96
      %s98 = sshll.u32 [#allocation2], 4
      %s99 = int_to_ptr.vmem [resolvable:$true] %s98
      %104 = dma.vmem_to_hbm [thread:$0]  %s99, 2048, %s3, [#allocation3], 128, 128, 8
    $region17: #{conv_bn.3} parent=1 // pred_fallthru
      _
    // Predicated region
    $region18: #{conv_bn.3} parent=1 // pred_check
      _
    $region19: #{conv_bn.3} parent=1 // pred_check_branch
      %106 = sbr.rel (0) target = $region21
    $region20: #{conv_bn.3} parent=1 // pred_region
      %107 = dma.done [#allocation3], 2048
    $region21: #{conv_bn.3} parent=1 // pred_fallthru
      _
    %108 = vsyncpa [#allocation3], 1

// kernel: conv_bn.2
$region0: #{conv_bn.2}
  #allocation0 [shape = 'u32[]', space=smem, size = 0x4, offset = 0x4, fixed_abs, tag = 'smem constant byte address 0x4 - core index']
  #allocation1 [shape = 'u32[144,128]{1,0:T(1,128)}', space=vmem, size = 0x12000, scoped, tag = 'internal scratch']
  %s0 = inlined_call_operand.vmem [shape: f32[2,72,384], index: 0, kind: input, shape index: {}]
  %s1 = inlined_call_operand.vmem [shape: f32[2,64,384], index: 1, kind: input, shape index: {}]
  %s2 = inlined_call_operand.vmem [shape: f32[3,384,128], index: 2, kind: input, shape index: {}]
  %s3 = inlined_call_operand.vmem [shape: f32[2,64,128], index: 3, kind: output, shape index: {0}]
  %s4 = inlined_call_operand.vmem [shape: f32[2,1,2,128], index: 4, kind: output, shape index: {1}]
  %5 = xla_tuple %s3, %s4
  %s6 = sld [smem:[#allocation0]]
  $region53: #{conv_bn.2} parent=0
    _
  %s8 = ssub.s32 1, %s6
  %s9 = scalar_select 0, %s8, %s6
  loop: start=0, step=1, limit=4
  $region2: #{conv_bn.2} parent=0 // loop_pre_header
    _
  $region3: #{conv_bn.2} parent=0 // loop_header
    %s11 = sphi 0, %s15
    %p12 = scmp.ge.s32.totalorder %s11, 4
    %s18 = sphi 0, %s30
    %s19 = sphi 0, %s26
    %s20 = sphi 0, %s18
    %s21 = sphi 0, %s19
    %s22 = sphi 0, %s20
    %s23 = sphi 0, %s21
    %s33 = sphi 0, %s35
    %s36 = sphi 0, %s33
    %s37 = sphi 0, %s36
    %s53 = sphi 0, %s37
    %s59 = sphi 0, %s61
    %s62 = sphi 0, %s59
    %s63 = sphi 0, %s62
    %s79 = sphi 0, %s63
    %s83 = sphi 0, %s83
    %s85 = sphi 0, %s83
    %s86 = sphi 0, %s85
    %s100 = sphi 0, %s86
    %s108 = sphi 0, %s110
    %s111 = sphi 0, %s108
    %s112 = sphi 0, %s111
    %s128 = sphi 0, %s112
    %s136 = sphi 0, %s138
    %s139 = sphi 0, %s136
    %s140 = sphi 0, %s139
    %s156 = sphi 0, %s140
  $region4: #{conv_bn.2} parent=0 // loop_header_branch
    %14 = sbr.rel (%p12) target = $region8
  $region5: #{conv_bn.2} parent=0 // loop_body
    %s16 = ssub.s32 %s11, 1
    %s17 = ssub.s32 %s11, 2
    %s24 = sadd.s32 1, %s19
    %p25 = scmp.ge.s32.totalorder %s24, 1
    %s26 = scalar_select %p25, 0, %s24
    %s27 = sadd.s32 1, %s18
    %s28 = scalar_select %p25, %s27, %s18
    %p29 = scmp.ge.s32.totalorder %s28, 2
    %s30 = scalar_select %p29, 0, %s28
    %s31 = ssub.s32 %s18, %s30
    %p32 = scmp.eq.s32.totalorder %s31, 0
    %s34 = sadd.s32 %s33, 1
    %s35 = scalar_select %p32, %s33, %s34
    %p38 = pneg %p32
    %p39 = scmp.eq.s32.totalorder %s11, 1
    %p40 = por %p38, %p39
    %p41 = scmp.ne.s32.totalorder %s33, %s36
    %p42 = scmp.eq.s32.totalorder %s11, 0
    %p43 = por %p41, %p42
    %p44 = scmp.ne.s32.totalorder %s33, %s36
    %p45 = scmp.eq.s32.totalorder %s16, 1
    %p46 = por %p44, %p45
    %p47 = scmp.ne.s32.totalorder %s36, %s37
    %p48 = scmp.eq.s32.totalorder %s16, 0
    %p49 = por %p47, %p48
    %p50 = scmp.ne.s32.totalorder %s36, %s37
    %p51 = scmp.eq.s32.totalorder %s17, 1
    %p52 = por %p50, %p51
    %p54 = scmp.ne.s32.totalorder %s37, %s53
    %p55 = scmp.eq.s32.totalorder %s17, 0
    %p56 = por %p54, %p55
    %s57 = ssub.s32 %s18, %s30
    %p58 = scmp.eq.s32.totalorder %s57, 0
    %s60 = sadd.s32 %s59, 1
    %s61 = scalar_select %p58, %s59, %s60
    %p64 = pneg %p58
    %p65 = scmp.eq.s32.totalorder %s11, 1
    %p66 = por %p64, %p65
    %p67 = scmp.ne.s32.totalorder %s59, %s62
    %p68 = scmp.eq.s32.totalorder %s11, 0
    %p69 = por %p67, %p68
    %p70 = scmp.ne.s32.totalorder %s59, %s62
    %p71 = scmp.eq.s32.totalorder %s16, 1
    %p72 = por %p70, %p71
    %p73 = scmp.ne.s32.totalorder %s62, %s63
    %p74 = scmp.eq.s32.totalorder %s16, 0
    %p75 = por %p73, %p74
    %p76 = scmp.ne.s32.totalorder %s62, %s63
    %p77 = scmp.eq.s32.totalorder %s17, 1
    %p78 = por %p76, %p77
    %p80 = scmp.ne.s32.totalorder %s63, %s79
    %p81 = scmp.eq.s32.totalorder %s17, 0
    %p82 = por %p80, %p81
    %s84 = sadd.s32 %s83, 1
    %p87 = scmp.eq.s32.totalorder %s11, 1
    %p88 = scmp.ne.s32.totalorder %s83, %s85
    %p89 = scmp.eq.s32.totalorder %s11, 0
    %p90 = por %p88, %p89
    %p91 = scmp.ne.s32.totalorder %s83, %s85
    %p92 = scmp.eq.s32.totalorder %s16, 1
    %p93 = por %p91, %p92
    %p94 = scmp.ne.s32.totalorder %s85, %s86
    %p95 = scmp.eq.s32.totalorder %s16, 0
    %p96 = por %p94, %p95
    %p97 = scmp.ne.s32.totalorder %s85, %s86
    %p98 = scmp.eq.s32.totalorder %s17, 1
    %p99 = por %p97, %p98
    %p101 = scmp.ne.s32.totalorder %s86, %s100
    %p102 = scmp.eq.s32.totalorder %s17, 0
    %p103 = por %p101, %p102
    %s104 = ssub.s32 %s18, %s30
    %s105 = ssub.s32 %s19, %s26
    %s106 = sor.u32 %s104, %s105
    %p107 = scmp.eq.s32.totalorder %s106, 0
    %s109 = sadd.s32 %s108, 1
    %s110 = scalar_select %p107, %s108, %s109
    %p113 = pneg %p107
    %p114 = scmp.eq.s32.totalorder %s11, 1
    %p115 = por %p113, %p114
    %p116 = scmp.ne.s32.totalorder %s108, %s111
    %p117 = scmp.eq.s32.totalorder %s11, 0
    %p118 = por %p116, %p117
    %p119 = scmp.ne.s32.totalorder %s108, %s111
    %p120 = scmp.eq.s32.totalorder %s16, 1
    %p121 = por %p119, %p120
    %p122 = scmp.ne.s32.totalorder %s111, %s112
    %p123 = scmp.eq.s32.totalorder %s16, 0
    %p124 = por %p122, %p123
    %p125 = scmp.ne.s32.totalorder %s111, %s112
    %p126 = scmp.eq.s32.totalorder %s17, 1
    %p127 = por %p125, %p126
    %p129 = scmp.ne.s32.totalorder %s112, %s128
    %p130 = scmp.eq.s32.totalorder %s17, 0
    %p131 = por %p129, %p130
    %s132 = ssub.s32 %s18, %s30
    %s133 = ssub.s32 %s19, %s26
    %s134 = sor.u32 %s132, %s133
    %p135 = scmp.eq.s32.totalorder %s134, 0
    %s137 = sadd.s32 %s136, 1
    %s138 = scalar_select %p135, %s136, %s137
    %p141 = pneg %p135
    %p142 = scmp.eq.s32.totalorder %s11, 1
    %p143 = por %p141, %p142
    %p144 = scmp.ne.s32.totalorder %s136, %s139
    %p145 = scmp.eq.s32.totalorder %s11, 0
    %p146 = por %p144, %p145
    %p147 = scmp.ne.s32.totalorder %s136, %s139
    %p148 = scmp.eq.s32.totalorder %s16, 1
    %p149 = por %p147, %p148
    %p150 = scmp.ne.s32.totalorder %s139, %s140
    %p151 = scmp.eq.s32.totalorder %s16, 0
    %p152 = por %p150, %p151
    %p153 = scmp.ne.s32.totalorder %s139, %s140
    %p154 = scmp.eq.s32.totalorder %s17, 1
    %p155 = por %p153, %p154
    %p157 = scmp.ne.s32.totalorder %s140, %s156
    %p158 = scmp.eq.s32.totalorder %s17, 0
    %p159 = por %p157, %p158
    %p160 = scmp.le.s32.totalorder 1, %s11
    %p161 = scmp.lt.s32.totalorder %s11, 3
    %p162 = pnand %p160, %p161
    %p163 = pneg %p162
    // Predicated region
    $region9: #{conv_bn.2} parent=5 // pred_check
      _
    $region10: #{conv_bn.2} parent=5 // pred_check_branch
      %165 = sbr.rel (%p162) target = $region12
    $region11: #{conv_bn.2} parent=5 // pred_region
      %s166 = ssub.s32 %s11, 1
      // Predicated region
      $region13: #{conv_bn.2} parent=11 // pred_check
        %p167 = pneg %p96
      $region14: #{conv_bn.2} parent=11 // pred_check_branch
        %169 = sbr.rel (%p167) target = $region16
      $region15: #{conv_bn.2} parent=11 // pred_region
        _
      $region16: #{conv_bn.2} parent=11 // pred_fallthru
        _
    $region12: #{conv_bn.2} parent=5 // pred_fallthru
      _
    %p170 = scmp.lt.s32.totalorder %s11, 2
    // Predicated region
    $region17: #{conv_bn.2} parent=5 // pred_check
      %p171 = pneg %p170
    $region18: #{conv_bn.2} parent=5 // pred_check_branch
      %173 = sbr.rel (%p171) target = $region20
    $region19: #{conv_bn.2} parent=5 // pred_region
      // Predicated region
      $region21: #{conv_bn.2} parent=19 // pred_check
        %p174 = pneg %p43
      $region22: #{conv_bn.2} parent=19 // pred_check_branch
        %176 = sbr.rel (%p174) target = $region24
      $region23: #{conv_bn.2} parent=19 // pred_region
        %p177 = scmp.lt.s32.totalorder %s18, 1
        %s178 = scalar_select %p177, %s18, 1
        %s179 = smul.addr %s178, 27
        %s180 = smul.addr %s179, 8
        %s181 = scalar_lea.vmem %s0, %s180
      $region24: #{conv_bn.2} parent=19 // pred_fallthru
        _
      // Predicated region
      $region25: #{conv_bn.2} parent=19 // pred_check
        %p182 = pneg %p69
      $region26: #{conv_bn.2} parent=19 // pred_check_branch
        %184 = sbr.rel (%p182) target = $region28
      $region27: #{conv_bn.2} parent=19 // pred_region
        %p185 = scmp.lt.s32.totalorder %s18, 1
        %s186 = scalar_select %p185, %s18, 1
        %s187 = smul.addr %s186, 24
        %s188 = smul.addr %s187, 8
        %s189 = scalar_lea.vmem %s1, %s188
      $region28: #{conv_bn.2} parent=19 // pred_fallthru
        _
    $region20: #{conv_bn.2} parent=5 // pred_fallthru
      _
    %p190 = scmp.le.s32.totalorder 1, %s11
    %p191 = scmp.lt.s32.totalorder %s11, 3
    %p192 = pnand %p190, %p191
    %p193 = pneg %p192
    // Predicated region
    $region29: #{conv_bn.2} parent=5 // pred_check
      _
    $region30: #{conv_bn.2} parent=5 // pred_check_branch
      %195 = sbr.rel (%p192) target = $region32
    $region31: #{conv_bn.2} parent=5 // pred_region
      %s196 = ssub.s32 %s11, 1
      %p197 = scmp.lt.s32.totalorder %s20, 1
      %s198 = scalar_select %p197, %s20, 1
      %s199 = smul.addr %s198, 27
      %s200 = smul.addr %s199, 8
      %s201 = scalar_lea.vmem %s0, %s200
      %p202 = pneg %p49
      %p203 = pneg %p46
      %p204 = scmp.lt.s32.totalorder %s20, 1
      %s205 = scalar_select %p204, %s20, 1
      %s206 = smul.addr %s205, 24
      %s207 = smul.addr %s206, 8
      %s208 = scalar_lea.vmem %s1, %s207
      %p209 = pneg %p75
      %p210 = pneg %p72
      %p211 = pneg %p96
      %p212 = pneg %p93
      %p213 = pneg %p124
      %p214 = pneg %p121
      %s215 = smul.u32 8, %s21
      %p216 = scmp.lt.s32.totalorder %s20, 1
      %s217 = scalar_select %p216, %s20, 1
      %p218 = scmp.lt.s32.totalorder %s215, 7
      %s219 = scalar_select %p218, %s215, 7
      %s220 = smul.addr %s217, 8
      %s221 = sadd.s32 %s219, %s220
      %s222 = smul.addr %s221, 8
      %s223 = scalar_lea.vmem %s3, %s222
      %p224 = pneg %p152
      %p225 = pneg %p149
      %p226 = scmp.lt.s32.totalorder %s20, 1
      %s227 = scalar_select %p226, %s20, 1
      %p228 = scmp.lt.s32.totalorder %s21, 0
      %s229 = scalar_select %p228, %s21, 0
      %s230 = sadd.s32 %s229, %s227
      %s231 = smul.addr %s230, 2
      %s232 = scalar_lea.vmem %s4, %s231
      %p233 = scmp.lt.s32.totalorder %s20, 1
      %s234 = scalar_select %p233, %s20, 1
      %s235 = smul.addr %s234, 27
      %s236 = smul.addr %s235, 8
      %s237 = scalar_lea.vmem %s0, %s236
      %p238 = scmp.lt.s32.totalorder %s20, 1
      %s239 = scalar_select %p238, %s20, 1
      %s240 = smul.addr %s239, 24
      %s241 = smul.addr %s240, 8
      %s242 = scalar_lea.vmem %s1, %s241
      %s243 = smul.u32 8, %s21
      %p244 = scmp.lt.s32.totalorder %s20, 1
      %s245 = scalar_select %p244, %s20, 1
      %p246 = scmp.lt.s32.totalorder %s243, 7
      %s247 = scalar_select %p246, %s243, 7
      %s248 = smul.addr %s245, 8
      %s249 = sadd.s32 %s247, %s248
      %s250 = smul.addr %s249, 8
      %s251 = scalar_lea.vmem %s3, %s250
      %s252 = smul.u32 8, %s21
      %p253 = scmp.lt.s32.totalorder %s20, 1
      %s254 = scalar_select %p253, %s20, 1
      %p255 = scmp.lt.s32.totalorder %s21, 0
      %s256 = scalar_select %p255, %s21, 0
      %s257 = sadd.s32 %s256, %s254
      %s258 = smul.addr %s257, 2
      %s259 = scalar_lea.vmem %s4, %s258
      %s260 = smul.u32 %s21, 64
      %s261 = sshra.s32 %s260, 3
      %s262 = sand.u32 %s260, 7
      %s263 = smul.u32 %s261, 3
      %s264 = smul.addr %s263, 8
      %s265 = scalar_lea.vmem %s237, %s264
      %v266 = vld [vmem:[%s265] sm:$0xff]
      %v267 = vld [vmem:[%s265 + $0x8] sm:$0xff]
      %v268 = vld [vmem:[%s265 + $0x10] sm:$0xff]
      %v269 = vld [vmem:[%s265 + $0x18] sm:$0xff]
      %v270 = vld [vmem:[%s265 + $0x20] sm:$0xff]
      %v271 = vld [vmem:[%s265 + $0x28] sm:$0xff]
      %v272 = vld [vmem:[%s265 + $0x30] sm:$0xff]
      %v273 = vld [vmem:[%s265 + $0x38] sm:$0xff]
      %v274 = vld [vmem:[%s265 + $0x40] sm:$0xff]
      %v275 = vld [vmem:[%s265 + $0x48] sm:$0xff]
      %v276 = vld [vmem:[%s265 + $0x50] sm:$0xff]
      %v277 = vld [vmem:[%s265 + $0x58] sm:$0xff]
      %v278 = vld [vmem:[%s265 + $0x60] sm:$0xff]
      %v279 = vld [vmem:[%s265 + $0x68] sm:$0xff]
      %v280 = vld [vmem:[%s265 + $0x70] sm:$0xff]
      %v281 = vld [vmem:[%s265 + $0x78] sm:$0xff]
      %v282 = vld [vmem:[%s265 + $0x80] sm:$0xff]
      %v283 = vld [vmem:[%s265 + $0x88] sm:$0xff]
      %v284 = vld [vmem:[%s265 + $0x90] sm:$0xff]
      %v285 = vld [vmem:[%s265 + $0x98] sm:$0xff]
      %v286 = vld [vmem:[%s265 + $0xa0] sm:$0xff]
      %v287 = vld [vmem:[%s265 + $0xa8] sm:$0xff]
      %v288 = vld [vmem:[%s265 + $0xb0] sm:$0xff]
      %v289 = vld [vmem:[%s265 + $0xb8] sm:$0xff]
      %s290 = smul.addr %s263, 8
      %s291 = scalar_lea.vmem %s242, %s290
      %v292 = vld [vmem:[%s291] sm:$0xff]
      %v293 = vld [vmem:[%s291 + $0x8] sm:$0xff]
      %v294 = vld [vmem:[%s291 + $0x10] sm:$0xff]
      %v295 = vld [vmem:[%s291 + $0x18] sm:$0xff]
      %v296 = vld [vmem:[%s291 + $0x20] sm:$0xff]
      %v297 = vld [vmem:[%s291 + $0x28] sm:$0xff]
      %v298 = vld [vmem:[%s291 + $0x30] sm:$0xff]
      %v299 = vld [vmem:[%s291 + $0x38] sm:$0xff]
      %v300 = vld [vmem:[%s291 + $0x40] sm:$0xff]
      %v301 = vld [vmem:[%s291 + $0x48] sm:$0xff]
      %v302 = vld [vmem:[%s291 + $0x50] sm:$0xff]
      %v303 = vld [vmem:[%s291 + $0x58] sm:$0xff]
      %v304 = vld [vmem:[%s291 + $0x60] sm:$0xff]
      %v305 = vld [vmem:[%s291 + $0x68] sm:$0xff]
      %v306 = vld [vmem:[%s291 + $0x70] sm:$0xff]
      %v307 = vld [vmem:[%s291 + $0x78] sm:$0xff]
      %v308 = vld [vmem:[%s291 + $0x80] sm:$0xff]
      %v309 = vld [vmem:[%s291 + $0x88] sm:$0xff]
      %v310 = vld [vmem:[%s291 + $0x90] sm:$0xff]
      %v311 = vld [vmem:[%s291 + $0x98] sm:$0xff]
      %v312 = vld [vmem:[%s291 + $0xa0] sm:$0xff]
      %v313 = vld [vmem:[%s291 + $0xa8] sm:$0xff]
      %v314 = vld [vmem:[%s291 + $0xb0] sm:$0xff]
      %v315 = vld [vmem:[%s291 + $0xb8] sm:$0xff]
      %s316 = sadd.s32 %s260, 8
      %s317 = sshra.s32 %s316, 3
      %s318 = sand.u32 %s316, 7
      %s319 = smul.u32 %s317, 3
      %s320 = smul.addr %s319, 8
      %s321 = scalar_lea.vmem %s237, %s320
      %v322 = vld [vmem:[%s321] sm:$0xff]
      %v323 = vld [vmem:[%s321 + $0x8] sm:$0xff]
      %v324 = vld [vmem:[%s321 + $0x10] sm:$0xff]
      %v325 = vld [vmem:[%s321 + $0x18] sm:$0xff]
      %v326 = vld [vmem:[%s321 + $0x20] sm:$0xff]
      %v327 = vld [vmem:[%s321 + $0x28] sm:$0xff]
      %v328 = vld [vmem:[%s321 + $0x30] sm:$0xff]
      %v329 = vld [vmem:[%s321 + $0x38] sm:$0xff]
      %v330 = vld [vmem:[%s321 + $0x40] sm:$0xff]
      %v331 = vld [vmem:[%s321 + $0x48] sm:$0xff]
      %v332 = vld [vmem:[%s321 + $0x50] sm:$0xff]
      %v333 = vld [vmem:[%s321 + $0x58] sm:$0xff]
      %v334 = vld [vmem:[%s321 + $0x60] sm:$0xff]
      %v335 = vld [vmem:[%s321 + $0x68] sm:$0xff]
      %v336 = vld [vmem:[%s321 + $0x70] sm:$0xff]
      %v337 = vld [vmem:[%s321 + $0x78] sm:$0xff]
      %v338 = vld [vmem:[%s321 + $0x80] sm:$0xff]
      %v339 = vld [vmem:[%s321 + $0x88] sm:$0xff]
      %v340 = vld [vmem:[%s321 + $0x90] sm:$0xff]
      %v341 = vld [vmem:[%s321 + $0x98] sm:$0xff]
      %v342 = vld [vmem:[%s321 + $0xa0] sm:$0xff]
      %v343 = vld [vmem:[%s321 + $0xa8] sm:$0xff]
      %v344 = vld [vmem:[%s321 + $0xb0] sm:$0xff]
      %v345 = vld [vmem:[%s321 + $0xb8] sm:$0xff]
      %v346 = vld [vmem:[%s2] sm:$0xff]
      %v347 = vld [vmem:[%s2 + $0x8] sm:$0xff]
      %v348 = vld [vmem:[%s2 + $0x10] sm:$0xff]
      %v349 = vld [vmem:[%s2 + $0x18] sm:$0xff]
      %v350 = vld [vmem:[%s2 + $0x20] sm:$0xff]
      %v351 = vld [vmem:[%s2 + $0x28] sm:$0xff]
      %v352 = vld [vmem:[%s2 + $0x30] sm:$0xff]
      %v353 = vld [vmem:[%s2 + $0x38] sm:$0xff]
      %v354 = vld [vmem:[%s2 + $0x40] sm:$0xff]
      %v355 = vld [vmem:[%s2 + $0x48] sm:$0xff]
      %v356 = vld [vmem:[%s2 + $0x50] sm:$0xff]
      %v357 = vld [vmem:[%s2 + $0x58] sm:$0xff]
      %v358 = vld [vmem:[%s2 + $0x60] sm:$0xff]
      %v359 = vld [vmem:[%s2 + $0x68] sm:$0xff]
      %v360 = vld [vmem:[%s2 + $0x70] sm:$0xff]
      %v361 = vld [vmem:[%s2 + $0x78] sm:$0xff]
      %v362 = vld [vmem:[%s2 + $0x80] sm:$0xff]
      %v363 = vld [vmem:[%s2 + $0x88] sm:$0xff]
      %v364 = vld [vmem:[%s2 + $0x90] sm:$0xff]
      %v365 = vld [vmem:[%s2 + $0x98] sm:$0xff]
      %v366 = vld [vmem:[%s2 + $0xa0] sm:$0xff]
      %v367 = vld [vmem:[%s2 + $0xa8] sm:$0xff]
      %v368 = vld [vmem:[%s2 + $0xb0] sm:$0xff]
      %v369 = vld [vmem:[%s2 + $0xb8] sm:$0xff]
      %v370 = vld [vmem:[%s2 + $0xc0] sm:$0xff]
      %v371 = vld [vmem:[%s2 + $0xc8] sm:$0xff]
      %v372 = vld [vmem:[%s2 + $0xd0] sm:$0xff]
      %v373 = vld [vmem:[%s2 + $0xd8] sm:$0xff]
      %v374 = vld [vmem:[%s2 + $0xe0] sm:$0xff]
      %v375 = vld [vmem:[%s2 + $0xe8] sm:$0xff]
      %v376 = vld [vmem:[%s2 + $0xf0] sm:$0xff]
      %v377 = vld [vmem:[%s2 + $0xf8] sm:$0xff]
      %v378 = vld [vmem:[%s2 + $0x100] sm:$0xff]
      %v379 = vld [vmem:[%s2 + $0x108] sm:$0xff]
      %v380 = vld [vmem:[%s2 + $0x110] sm:$0xff]
      %v381 = vld [vmem:[%s2 + $0x118] sm:$0xff]
      %v382 = vld [vmem:[%s2 + $0x120] sm:$0xff]
      %v383 = vld [vmem:[%s2 + $0x128] sm:$0xff]
      %v384 = vld [vmem:[%s2 + $0x130] sm:$0xff]
      %v385 = vld [vmem:[%s2 + $0x138] sm:$0xff]
      %v386 = vld [vmem:[%s2 + $0x140] sm:$0xff]
      %v387 = vld [vmem:[%s2 + $0x148] sm:$0xff]
      %v388 = vld [vmem:[%s2 + $0x150] sm:$0xff]
      %v389 = vld [vmem:[%s2 + $0x158] sm:$0xff]
      %v390 = vld [vmem:[%s2 + $0x160] sm:$0xff]
      %v391 = vld [vmem:[%s2 + $0x168] sm:$0xff]
      %v392 = vld [vmem:[%s2 + $0x170] sm:$0xff]
      %v393 = vld [vmem:[%s2 + $0x178] sm:$0xff]
      %s394 = scalar_lea.vmem %s2, 384
      %v395 = vld [vmem:[%s394] sm:$0xff]
      %v396 = vld [vmem:[%s394 + $0x8] sm:$0xff]
      %v397 = vld [vmem:[%s394 + $0x10] sm:$0xff]
      %v398 = vld [vmem:[%s394 + $0x18] sm:$0xff]
      %v399 = vld [vmem:[%s394 + $0x20] sm:$0xff]
      %v400 = vld [vmem:[%s394 + $0x28] sm:$0xff]
      %v401 = vld [vmem:[%s394 + $0x30] sm:$0xff]
      %v402 = vld [vmem:[%s394 + $0x38] sm:$0xff]
      %v403 = vld [vmem:[%s394 + $0x40] sm:$0xff]
      %v404 = vld [vmem:[%s394 + $0x48] sm:$0xff]
      %v405 = vld [vmem:[%s394 + $0x50] sm:$0xff]
      %v406 = vld [vmem:[%s394 + $0x58] sm:$0xff]
      %v407 = vld [vmem:[%s394 + $0x60] sm:$0xff]
      %v408 = vld [vmem:[%s394 + $0x68] sm:$0xff]
      %v409 = vld [vmem:[%s394 + $0x70] sm:$0xff]
      %v410 = vld [vmem:[%s394 + $0x78] sm:$0xff]
      %v411 = vld [vmem:[%s394 + $0x80] sm:$0xff]
      %v412 = vld [vmem:[%s394 + $0x88] sm:$0xff]
      %v413 = vld [vmem:[%s394 + $0x90] sm:$0xff]
      %v414 = vld [vmem:[%s394 + $0x98] sm:$0xff]
      %v415 = vld [vmem:[%s394 + $0xa0] sm:$0xff]
      %v416 = vld [vmem:[%s394 + $0xa8] sm:$0xff]
      %v417 = vld [vmem:[%s394 + $0xb0] sm:$0xff]
      %v418 = vld [vmem:[%s394 + $0xb8] sm:$0xff]
      %v419 = vld [vmem:[%s394 + $0xc0] sm:$0xff]
      %v420 = vld [vmem:[%s394 + $0xc8] sm:$0xff]
      %v421 = vld [vmem:[%s394 + $0xd0] sm:$0xff]
      %v422 = vld [vmem:[%s394 + $0xd8] sm:$0xff]
      %v423 = vld [vmem:[%s394 + $0xe0] sm:$0xff]
      %v424 = vld [vmem:[%s394 + $0xe8] sm:$0xff]
      %v425 = vld [vmem:[%s394 + $0xf0] sm:$0xff]
      %v426 = vld [vmem:[%s394 + $0xf8] sm:$0xff]
      %v427 = vld [vmem:[%s394 + $0x100] sm:$0xff]
      %v428 = vld [vmem:[%s394 + $0x108] sm:$0xff]
      %v429 = vld [vmem:[%s394 + $0x110] sm:$0xff]
      %v430 = vld [vmem:[%s394 + $0x118] sm:$0xff]
      %v431 = vld [vmem:[%s394 + $0x120] sm:$0xff]
      %v432 = vld [vmem:[%s394 + $0x128] sm:$0xff]
      %v433 = vld [vmem:[%s394 + $0x130] sm:$0xff]
      %v434 = vld [vmem:[%s394 + $0x138] sm:$0xff]
      %v435 = vld [vmem:[%s394 + $0x140] sm:$0xff]
      %v436 = vld [vmem:[%s394 + $0x148] sm:$0xff]
      %v437 = vld [vmem:[%s394 + $0x150] sm:$0xff]
      %v438 = vld [vmem:[%s394 + $0x158] sm:$0xff]
      %v439 = vld [vmem:[%s394 + $0x160] sm:$0xff]
      %v440 = vld [vmem:[%s394 + $0x168] sm:$0xff]
      %v441 = vld [vmem:[%s394 + $0x170] sm:$0xff]
      %v442 = vld [vmem:[%s394 + $0x178] sm:$0xff]
      %443 = vmatprep.subr.mxu0 0.0
      %444 = vmatpush1.msra.mxu0 %v410
      %445 = vmatprep.subr.mxu0 0.0
      %446 = vmatpush1.msra.mxu0 %v409
      %447 = vmatprep.subr.mxu0 0.0
      %448 = vmatpush1.msra.mxu0 %v408
      %449 = vmatprep.subr.mxu0 0.0
      %450 = vmatpush1.msra.mxu0 %v407
      %451 = vmatprep.subr.mxu0 0.0
      %452 = vmatpush1.msra.mxu0 %v406
      %453 = vmatprep.subr.mxu0 0.0
      %454 = vmatpush1.msra.mxu0 %v405
      %455 = vmatprep.subr.mxu0 0.0
      %456 = vmatpush1.msra.mxu0 %v404
      %457 = vmatprep.subr.mxu0 0.0
      %458 = vmatpush1.msra.mxu0 %v403
      %459 = vmatprep.subr.mxu0 0.0
      %460 = vmatpush1.msra.mxu0 %v402
      %461 = vmatprep.subr.mxu0 0.0
      %462 = vmatpush1.msra.mxu0 %v401
      %463 = vmatprep.subr.mxu0 0.0
      %464 = vmatpush1.msra.mxu0 %v400
      %465 = vmatprep.subr.mxu0 0.0
      %466 = vmatpush1.msra.mxu0 %v399
      %467 = vmatprep.subr.mxu0 0.0
      %468 = vmatpush1.msra.mxu0 %v398
      %469 = vmatprep.subr.mxu0 0.0
      %470 = vmatpush1.msra.mxu0 %v397
      %471 = vmatprep.subr.mxu0 0.0
      %472 = vmatpush1.msra.mxu0 %v396
      %473 = vmatprep.subr.mxu0 0.0
      %474 = vmatpush1.msra.mxu0 %v395
      %475 = vmatprep.subr.mxu0 0.0
      %476 = vmatpush2.msra.mxu0 %v426
      %477 = vmatprep.subr.mxu0 0.0
      %478 = vmatpush2.msra.mxu0 %v425
      %479 = vmatprep.subr.mxu0 0.0
      %480 = vmatpush2.msra.mxu0 %v424
      %481 = vmatprep.subr.mxu0 0.0
      %482 = vmatpush2.msra.mxu0 %v423
      %483 = vmatprep.subr.mxu0 0.0
      %484 = vmatpush2.msra.mxu0 %v422
      %485 = vmatprep.subr.mxu0 0.0
      %486 = vmatpush2.msra.mxu0 %v421
      %487 = vmatprep.subr.mxu0 0.0
      %488 = vmatpush2.msra.mxu0 %v420
      %489 = vmatprep.subr.mxu0 0.0
      %490 = vmatpush2.msra.mxu0 %v419
      %491 = vmatprep.subr.mxu0 0.0
      %492 = vmatpush2.msra.mxu0 %v418
      %493 = vmatprep.subr.mxu0 0.0
      %494 = vmatpush2.msra.mxu0 %v417
      %495 = vmatprep.subr.mxu0 0.0
      %496 = vmatpush2.msra.mxu0 %v416
      %497 = vmatprep.subr.mxu0 0.0
      %498 = vmatpush2.msra.mxu0 %v415
      %499 = vmatprep.subr.mxu0 0.0
      %500 = vmatpush2.msra.mxu0 %v414
      %501 = vmatprep.subr.mxu0 0.0
      %502 = vmatpush2.msra.mxu0 %v413
      %503 = vmatprep.subr.mxu0 0.0
      %504 = vmatpush2.msra.mxu0 %v412
      %505 = vmatprep.subr.mxu0 0.0
      %506 = vmatpush2.msra.mxu0 %v411
      %507 = vmatprep.mubr.f32.mxu0 %v293
      %508 = vmatmul.mubr.f32.gmra.mxu0 %v292
      %v509 = vpop.f32.mrf.mxu0
      %v510 = vadd.f32 0.0, %v509
      %v511 = vpop.f32.mrf.mxu0
      %512 = vmatprep.mubr.f32.mxu0 %v296
      %513 = vmatmul.mubr.f32.gmra.mxu0 %v295
      %v514 = vpop.f32.mrf.mxu0
      %v515 = vadd.f32 0.0, %v514
      %v516 = vpop.f32.mrf.mxu0
      %517 = vmatprep.mubr.f32.mxu0 %v299
      %518 = vmatmul.mubr.f32.gmra.mxu0 %v298
      %v519 = vpop.f32.mrf.mxu0
      %v520 = vadd.f32 0.0, %v519
      %v521 = vpop.f32.mrf.mxu0
      %522 = vmatprep.mubr.f32.mxu0 %v302
      %523 = vmatmul.mubr.f32.gmra.mxu0 %v301
      %v524 = vpop.f32.mrf.mxu0
      %v525 = vadd.f32 0.0, %v524
      %v526 = vpop.f32.mrf.mxu0
      %527 = vmatprep.mubr.f32.mxu0 %v305
      %528 = vmatmul.mubr.f32.gmra.mxu0 %v304
      %v529 = vpop.f32.mrf.mxu0
      %v530 = vadd.f32 0.0, %v529
      %v531 = vpop.f32.mrf.mxu0
      %532 = vmatprep.mubr.f32.mxu0 %v308
      %533 = vmatmul.mubr.f32.gmra.mxu0 %v307
      %v534 = vpop.f32.mrf.mxu0
      %v535 = vadd.f32 0.0, %v534
      %v536 = vpop.f32.mrf.mxu0
      %537 = vmatprep.mubr.f32.mxu0 %v311
      %538 = vmatmul.mubr.f32.gmra.mxu0 %v310
      %v539 = vpop.f32.mrf.mxu0
      %v540 = vadd.f32 0.0, %v539
      %v541 = vpop.f32.mrf.mxu0
      %542 = vmatprep.mubr.f32.mxu0 %v314
      %543 = vmatmul.mubr.f32.gmra.mxu0 %v313
      %v544 = vpop.f32.mrf.mxu0
      %v545 = vadd.f32 0.0, %v544
      %v546 = vpop.f32.mrf.mxu0
      %547 = vdwg.mxu0
      %548 = vmatprep.subr.mxu0 0.0
      %549 = vmatpush1.msra.mxu0 %v442
      %550 = vmatprep.subr.mxu0 0.0
      %551 = vmatpush1.msra.mxu0 %v441
      %552 = vmatprep.subr.mxu0 0.0
      %553 = vmatpush1.msra.mxu0 %v440
      %554 = vmatprep.subr.mxu0 0.0
      %555 = vmatpush1.msra.mxu0 %v439
      %556 = vmatprep.subr.mxu0 0.0
      %557 = vmatpush1.msra.mxu0 %v438
      %558 = vmatprep.subr.mxu0 0.0
      %559 = vmatpush1.msra.mxu0 %v437
      %560 = vmatprep.subr.mxu0 0.0
      %561 = vmatpush1.msra.mxu0 %v436
      %562 = vmatprep.subr.mxu0 0.0
      %563 = vmatpush1.msra.mxu0 %v435
      %564 = vmatprep.subr.mxu0 0.0
      %565 = vmatpush1.msra.mxu0 %v434
      %566 = vmatprep.subr.mxu0 0.0
      %567 = vmatpush1.msra.mxu0 %v433
      %568 = vmatprep.subr.mxu0 0.0
      %569 = vmatpush1.msra.mxu0 %v432
      %570 = vmatprep.subr.mxu0 0.0
      %571 = vmatpush1.msra.mxu0 %v431
      %572 = vmatprep.subr.mxu0 0.0
      %573 = vmatpush1.msra.mxu0 %v430
      %574 = vmatprep.subr.mxu0 0.0
      %575 = vmatpush1.msra.mxu0 %v429
      %576 = vmatprep.subr.mxu0 0.0
      %577 = vmatpush1.msra.mxu0 %v428
      %578 = vmatprep.subr.mxu0 0.0
      %579 = vmatpush1.msra.mxu0 %v427
      %580 = vmatprep.subr.mxu0 0.0
      %581 = vmatpush2.msra.mxu0 0.0
      %582 = vmatprep.subr.mxu0 0.0
      %583 = vmatpush2.msra.mxu0 0.0
      %584 = vmatprep.subr.mxu0 0.0
      %585 = vmatpush2.msra.mxu0 0.0
      %586 = vmatprep.subr.mxu0 0.0
      %587 = vmatpush2.msra.mxu0 0.0
      %588 = vmatprep.subr.mxu0 0.0
      %589 = vmatpush2.msra.mxu0 0.0
      %590 = vmatprep.subr.mxu0 0.0
      %591 = vmatpush2.msra.mxu0 0.0
      %592 = vmatprep.subr.mxu0 0.0
      %593 = vmatpush2.msra.mxu0 0.0
      %594 = vmatprep.subr.mxu0 0.0
      %595 = vmatpush2.msra.mxu0 0.0
      %596 = vmatprep.subr.mxu0 0.0
      %597 = vmatpush2.msra.mxu0 0.0
      %598 = vmatprep.subr.mxu0 0.0
      %599 = vmatpush2.msra.mxu0 0.0
      %600 = vmatprep.subr.mxu0 0.0
      %601 = vmatpush2.msra.mxu0 0.0
      %602 = vmatprep.subr.mxu0 0.0
      %603 = vmatpush2.msra.mxu0 0.0
      %604 = vmatprep.subr.mxu0 0.0
      %605 = vmatpush2.msra.mxu0 0.0
      %606 = vmatprep.subr.mxu0 0.0
      %607 = vmatpush2.msra.mxu0 0.0
      %608 = vmatprep.subr.mxu0 0.0
      %609 = vmatpush2.msra.mxu0 0.0
      %610 = vmatprep.subr.mxu0 0.0
      %611 = vmatpush2.msra.mxu0 0.0
      %612 = vmatprep.mubr.f32.mxu0 0.0
      %613 = vmatmul.mubr.f32.gmra.mxu0 %v294
      %v614 = vpop.f32.mrf.mxu0
      %v615 = vadd.f32 %v510, %v614
      %v616 = vpop.f32.mrf.mxu0
      %617 = vmatprep.mubr.f32.mxu0 0.0
      %618 = vmatmul.mubr.f32.gmra.mxu0 %v297
      %v619 = vpop.f32.mrf.mxu0
      %v620 = vadd.f32 %v515, %v619
      %v621 = vpop.f32.mrf.mxu0
      %622 = vmatprep.mubr.f32.mxu0 0.0
      %623 = vmatmul.mubr.f32.gmra.mxu0 %v300
      %v624 = vpop.f32.mrf.mxu0
      %v625 = vadd.f32 %v520, %v624
      %v626 = vpop.f32.mrf.mxu0
      %627 = vmatprep.mubr.f32.mxu0 0.0
      %628 = vmatmul.mubr.f32.gmra.mxu0 %v303
      %v629 = vpop.f32.mrf.mxu0
      %v630 = vadd.f32 %v525, %v629
      %v631 = vpop.f32.mrf.mxu0
      %632 = vmatprep.mubr.f32.mxu0 0.0
      %633 = vmatmul.mubr.f32.gmra.mxu0 %v306
      %v634 = vpop.f32.mrf.mxu0
      %v635 = vadd.f32 %v530, %v634
      %v636 = vpop.f32.mrf.mxu0
      %637 = vmatprep.mubr.f32.mxu0 0.0
      %638 = vmatmul.mubr.f32.gmra.mxu0 %v309
      %v639 = vpop.f32.mrf.mxu0
      %v640 = vadd.f32 %v535, %v639
      %v641 = vpop.f32.mrf.mxu0
      %642 = vmatprep.mubr.f32.mxu0 0.0
      %643 = vmatmul.mubr.f32.gmra.mxu0 %v312
      %v644 = vpop.f32.mrf.mxu0
      %v645 = vadd.f32 %v540, %v644
      %v646 = vpop.f32.mrf.mxu0
      %647 = vmatprep.mubr.f32.mxu0 0.0
      %648 = vmatmul.mubr.f32.gmra.mxu0 %v315
      %v649 = vpop.f32.mrf.mxu0
      %v650 = vadd.f32 %v545, %v649
      %v651 = vpop.f32.mrf.mxu0
      %652 = vdwg.mxu0
      %653 = vmatprep.subr.mxu0 0.0
      %654 = vmatpush1.msra.mxu0 %v361
      %655 = vmatprep.subr.mxu0 0.0
      %656 = vmatpush1.msra.mxu0 %v360
      %657 = vmatprep.subr.mxu0 0.0
      %658 = vmatpush1.msra.mxu0 %v359
      %659 = vmatprep.subr.mxu0 0.0
      %660 = vmatpush1.msra.mxu0 %v358
      %661 = vmatprep.subr.mxu0 0.0
      %662 = vmatpush1.msra.mxu0 %v357
      %663 = vmatprep.subr.mxu0 0.0
      %664 = vmatpush1.msra.mxu0 %v356
      %665 = vmatprep.subr.mxu0 0.0
      %666 = vmatpush1.msra.mxu0 %v355
      %667 = vmatprep.subr.mxu0 0.0
      %668 = vmatpush1.msra.mxu0 %v354
      %669 = vmatprep.subr.mxu0 0.0
      %670 = vmatpush1.msra.mxu0 %v353
      %671 = vmatprep.subr.mxu0 0.0
      %672 = vmatpush1.msra.mxu0 %v352
      %673 = vmatprep.subr.mxu0 0.0
      %674 = vmatpush1.msra.mxu0 %v351
      %675 = vmatprep.subr.mxu0 0.0
      %676 = vmatpush1.msra.mxu0 %v350
      %677 = vmatprep.subr.mxu0 0.0
      %678 = vmatpush1.msra.mxu0 %v349
      %679 = vmatprep.subr.mxu0 0.0
      %680 = vmatpush1.msra.mxu0 %v348
      %681 = vmatprep.subr.mxu0 0.0
      %682 = vmatpush1.msra.mxu0 %v347
      %683 = vmatprep.subr.mxu0 0.0
      %684 = vmatpush1.msra.mxu0 %v346
      %685 = vmatprep.subr.mxu0 0.0
      %686 = vmatpush2.msra.mxu0 %v377
      %687 = vmatprep.subr.mxu0 0.0
      %688 = vmatpush2.msra.mxu0 %v376
      %689 = vmatprep.subr.mxu0 0.0
      %690 = vmatpush2.msra.mxu0 %v375
      %691 = vmatprep.subr.mxu0 0.0
      %692 = vmatpush2.msra.mxu0 %v374
      %693 = vmatprep.subr.mxu0 0.0
      %694 = vmatpush2.msra.mxu0 %v373
      %695 = vmatprep.subr.mxu0 0.0
      %696 = vmatpush2.msra.mxu0 %v372
      %697 = vmatprep.subr.mxu0 0.0
      %698 = vmatpush2.msra.mxu0 %v371
      %699 = vmatprep.subr.mxu0 0.0
      %700 = vmatpush2.msra.mxu0 %v370
      %701 = vmatprep.subr.mxu0 0.0
      %702 = vmatpush2.msra.mxu0 %v369
      %703 = vmatprep.subr.mxu0 0.0
      %704 = vmatpush2.msra.mxu0 %v368
      %705 = vmatprep.subr.mxu0 0.0
      %706 = vmatpush2.msra.mxu0 %v367
      %707 = vmatprep.subr.mxu0 0.0
      %708 = vmatpush2.msra.mxu0 %v366
      %709 = vmatprep.subr.mxu0 0.0
      %710 = vmatpush2.msra.mxu0 %v365
      %711 = vmatprep.subr.mxu0 0.0
      %712 = vmatpush2.msra.mxu0 %v364
      %713 = vmatprep.subr.mxu0 0.0
      %714 = vmatpush2.msra.mxu0 %v363
      %715 = vmatprep.subr.mxu0 0.0
      %716 = vmatpush2.msra.mxu0 %v362
      %717 = vmatprep.mubr.f32.mxu0 %v267
      %718 = vmatmul.mubr.f32.gmra.mxu0 %v266
      %v719 = vpop.f32.mrf.mxu0
      %v720 = vadd.f32 %v615, %v719
      %v721 = vpop.f32.mrf.mxu0
      %722 = vmatprep.mubr.f32.mxu0 %v270
      %723 = vmatmul.mubr.f32.gmra.mxu0 %v269
      %v724 = vpop.f32.mrf.mxu0
      %v725 = vadd.f32 %v620, %v724
      %v726 = vpop.f32.mrf.mxu0
      %727 = vmatprep.mubr.f32.mxu0 %v273
      %728 = vmatmul.mubr.f32.gmra.mxu0 %v272
      %v729 = vpop.f32.mrf.mxu0
      %v730 = vadd.f32 %v625, %v729
      %v731 = vpop.f32.mrf.mxu0
      %732 = vmatprep.mubr.f32.mxu0 %v276
      %733 = vmatmul.mubr.f32.gmra.mxu0 %v275
      %v734 = vpop.f32.mrf.mxu0
      %v735 = vadd.f32 %v630, %v734
      %v736 = vpop.f32.mrf.mxu0
      %737 = vmatprep.mubr.f32.mxu0 %v279
      %738 = vmatmul.mubr.f32.gmra.mxu0 %v278
      %v739 = vpop.f32.mrf.mxu0
      %v740 = vadd.f32 %v635, %v739
      %v741 = vpop.f32.mrf.mxu0
      %742 = vmatprep.mubr.f32.mxu0 %v282
      %743 = vmatmul.mubr.f32.gmra.mxu0 %v281
      %v744 = vpop.f32.mrf.mxu0
      %v745 = vadd.f32 %v640, %v744
      %v746 = vpop.f32.mrf.mxu0
      %747 = vmatprep.mubr.f32.mxu0 %v285
      %748 = vmatmul.mubr.f32.gmra.mxu0 %v284
      %v749 = vpop.f32.mrf.mxu0
      %v750 = vadd.f32 %v645, %v749
      %v751 = vpop.f32.mrf.mxu0
      %752 = vmatprep.mubr.f32.mxu0 %v288
      %753 = vmatmul.mubr.f32.gmra.mxu0 %v287
      %v754 = vpop.f32.mrf.mxu0
      %v755 = vadd.f32 %v650, %v754
      %v756 = vpop.f32.mrf.mxu0
      %757 = vdwg.mxu0
      %758 = vmatprep.subr.mxu0 0.0
      %759 = vmatpush1.msra.mxu0 %v393
      %760 = vmatprep.subr.mxu0 0.0
      %761 = vmatpush1.msra.mxu0 %v392
      %762 = vmatprep.subr.mxu0 0.0
      %763 = vmatpush1.msra.mxu0 %v391
      %764 = vmatprep.subr.mxu0 0.0
      %765 = vmatpush1.msra.mxu0 %v390
      %766 = vmatprep.subr.mxu0 0.0
      %767 = vmatpush1.msra.mxu0 %v389
      %768 = vmatprep.subr.mxu0 0.0
      %769 = vmatpush1.msra.mxu0 %v388
      %770 = vmatprep.subr.mxu0 0.0
      %771 = vmatpush1.msra.mxu0 %v387
      %772 = vmatprep.subr.mxu0 0.0
      %773 = vmatpush1.msra.mxu0 %v386
      %774 = vmatprep.subr.mxu0 0.0
      %775 = vmatpush1.msra.mxu0 %v385
      %776 = vmatprep.subr.mxu0 0.0
      %777 = vmatpush1.msra.mxu0 %v384
      %778 = vmatprep.subr.mxu0 0.0
      %779 = vmatpush1.msra.mxu0 %v383
      %780 = vmatprep.subr.mxu0 0.0
      %781 = vmatpush1.msra.mxu0 %v382
      %782 = vmatprep.subr.mxu0 0.0
      %783 = vmatpush1.msra.mxu0 %v381
      %784 = vmatprep.subr.mxu0 0.0
      %785 = vmatpush1.msra.mxu0 %v380
      %786 = vmatprep.subr.mxu0 0.0
      %787 = vmatpush1.msra.mxu0 %v379
      %788 = vmatprep.subr.mxu0 0.0
      %789 = vmatpush1.msra.mxu0 %v378
      %790 = vmatprep.subr.mxu0 0.0
      %791 = vmatpush2.msra.mxu0 0.0
      %792 = vmatprep.subr.mxu0 0.0
      %793 = vmatpush2.msra.mxu0 0.0
      %794 = vmatprep.subr.mxu0 0.0
      %795 = vmatpush2.msra.mxu0 0.0
      %796 = vmatprep.subr.mxu0 0.0
      %797 = vmatpush2.msra.mxu0 0.0
      %798 = vmatprep.subr.mxu0 0.0
      %799 = vmatpush2.msra.mxu0 0.0
      %800 = vmatprep.subr.mxu0 0.0
      %801 = vmatpush2.msra.mxu0 0.0
      %802 = vmatprep.subr.mxu0 0.0
      %803 = vmatpush2.msra.mxu0 0.0
      %804 = vmatprep.subr.mxu0 0.0
      %805 = vmatpush2.msra.mxu0 0.0
      %806 = vmatprep.subr.mxu0 0.0
      %807 = vmatpush2.msra.mxu0 0.0
      %808 = vmatprep.subr.mxu0 0.0
      %809 = vmatpush2.msra.mxu0 0.0
      %810 = vmatprep.subr.mxu0 0.0
      %811 = vmatpush2.msra.mxu0 0.0
      %812 = vmatprep.subr.mxu0 0.0
      %813 = vmatpush2.msra.mxu0 0.0
      %814 = vmatprep.subr.mxu0 0.0
      %815 = vmatpush2.msra.mxu0 0.0
      %816 = vmatprep.subr.mxu0 0.0
      %817 = vmatpush2.msra.mxu0 0.0
      %818 = vmatprep.subr.mxu0 0.0
      %819 = vmatpush2.msra.mxu0 0.0
      %820 = vmatprep.subr.mxu0 0.0
      %821 = vmatpush2.msra.mxu0 0.0
      %822 = vmatprep.mubr.f32.mxu0 0.0
      %823 = vmatmul.mubr.f32.gmra.mxu0 %v268
      %v824 = vpop.f32.mrf.mxu0
      %v825 = vadd.f32 %v720, %v824
      %v826 = vpop.f32.mrf.mxu0
      %827 = vmatprep.mubr.f32.mxu0 0.0
      %828 = vmatmul.mubr.f32.gmra.mxu0 %v271
      %v829 = vpop.f32.mrf.mxu0
      %v830 = vadd.f32 %v725, %v829
      %v831 = vpop.f32.mrf.mxu0
      %832 = vmatprep.mubr.f32.mxu0 0.0
      %833 = vmatmul.mubr.f32.gmra.mxu0 %v274
      %v834 = vpop.f32.mrf.mxu0
      %v835 = vadd.f32 %v730, %v834
      %v836 = vpop.f32.mrf.mxu0
      %837 = vmatprep.mubr.f32.mxu0 0.0
      %838 = vmatmul.mubr.f32.gmra.mxu0 %v277
      %v839 = vpop.f32.mrf.mxu0
      %v840 = vadd.f32 %v735, %v839
      %v841 = vpop.f32.mrf.mxu0
      %842 = vmatprep.mubr.f32.mxu0 0.0
      %843 = vmatmul.mubr.f32.gmra.mxu0 %v280
      %v844 = vpop.f32.mrf.mxu0
      %v845 = vadd.f32 %v740, %v844
      %v846 = vpop.f32.mrf.mxu0
      %847 = vmatprep.mubr.f32.mxu0 0.0
      %848 = vmatmul.mubr.f32.gmra.mxu0 %v283
      %v849 = vpop.f32.mrf.mxu0
      %v850 = vadd.f32 %v745, %v849
      %v851 = vpop.f32.mrf.mxu0
      %852 = vmatprep.mubr.f32.mxu0 0.0
      %853 = vmatmul.mubr.f32.gmra.mxu0 %v286
      %v854 = vpop.f32.mrf.mxu0
      %v855 = vadd.f32 %v750, %v854
      %v856 = vpop.f32.mrf.mxu0
      %857 = vmatprep.mubr.f32.mxu0 0.0
      %858 = vmatmul.mubr.f32.gmra.mxu0 %v289
      %v859 = vpop.f32.mrf.mxu0
      %v860 = vadd.f32 %v755, %v859
      %v861 = vpop.f32.mrf.mxu0
      %862 = vdwg.mxu0
      %s863 = scalar_lea.vmem %s2, 768
      %v864 = vld [vmem:[%s863] sm:$0xff]
      %v865 = vld [vmem:[%s863 + $0x8] sm:$0xff]
      %v866 = vld [vmem:[%s863 + $0x10] sm:$0xff]
      %v867 = vld [vmem:[%s863 + $0x18] sm:$0xff]
      %v868 = vld [vmem:[%s863 + $0x20] sm:$0xff]
      %v869 = vld [vmem:[%s863 + $0x28] sm:$0xff]
      %v870 = vld [vmem:[%s863 + $0x30] sm:$0xff]
      %v871 = vld [vmem:[%s863 + $0x38] sm:$0xff]
      %v872 = vld [vmem:[%s863 + $0x40] sm:$0xff]
      %v873 = vld [vmem:[%s863 + $0x48] sm:$0xff]
      %v874 = vld [vmem:[%s863 + $0x50] sm:$0xff]
      %v875 = vld [vmem:[%s863 + $0x58] sm:$0xff]
      %v876 = vld [vmem:[%s863 + $0x60] sm:$0xff]
      %v877 = vld [vmem:[%s863 + $0x68] sm:$0xff]
      %v878 = vld [vmem:[%s863 + $0x70] sm:$0xff]
      %v879 = vld [vmem:[%s863 + $0x78] sm:$0xff]
      %v880 = vld [vmem:[%s863 + $0x80] sm:$0xff]
      %v881 = vld [vmem:[%s863 + $0x88] sm:$0xff]
      %v882 = vld [vmem:[%s863 + $0x90] sm:$0xff]
      %v883 = vld [vmem:[%s863 + $0x98] sm:$0xff]
      %v884 = vld [vmem:[%s863 + $0xa0] sm:$0xff]
      %v885 = vld [vmem:[%s863 + $0xa8] sm:$0xff]
      %v886 = vld [vmem:[%s863 + $0xb0] sm:$0xff]
      %v887 = vld [vmem:[%s863 + $0xb8] sm:$0xff]
      %v888 = vld [vmem:[%s863 + $0xc0] sm:$0xff]
      %v889 = vld [vmem:[%s863 + $0xc8] sm:$0xff]
      %v890 = vld [vmem:[%s863 + $0xd0] sm:$0xff]
      %v891 = vld [vmem:[%s863 + $0xd8] sm:$0xff]
      %v892 = vld [vmem:[%s863 + $0xe0] sm:$0xff]
      %v893 = vld [vmem:[%s863 + $0xe8] sm:$0xff]
      %v894 = vld [vmem:[%s863 + $0xf0] sm:$0xff]
      %v895 = vld [vmem:[%s863 + $0xf8] sm:$0xff]
      %v896 = vld [vmem:[%s863 + $0x100] sm:$0xff]
      %v897 = vld [vmem:[%s863 + $0x108] sm:$0xff]
      %v898 = vld [vmem:[%s863 + $0x110] sm:$0xff]
      %v899 = vld [vmem:[%s863 + $0x118] sm:$0xff]
      %v900 = vld [vmem:[%s863 + $0x120] sm:$0xff]
      %v901 = vld [vmem:[%s863 + $0x128] sm:$0xff]
      %v902 = vld [vmem:[%s863 + $0x130] sm:$0xff]
      %v903 = vld [vmem:[%s863 + $0x138] sm:$0xff]
      %v904 = vld [vmem:[%s863 + $0x140] sm:$0xff]
      %v905 = vld [vmem:[%s863 + $0x148] sm:$0xff]
      %v906 = vld [vmem:[%s863 + $0x150] sm:$0xff]
      %v907 = vld [vmem:[%s863 + $0x158] sm:$0xff]
      %v908 = vld [vmem:[%s863 + $0x160] sm:$0xff]
      %v909 = vld [vmem:[%s863 + $0x168] sm:$0xff]
      %v910 = vld [vmem:[%s863 + $0x170] sm:$0xff]
      %v911 = vld [vmem:[%s863 + $0x178] sm:$0xff]
      %912 = vmatprep.subr.mxu0 0.0
      %913 = vmatpush1.msra.mxu0 %v879
      %914 = vmatprep.subr.mxu0 0.0
      %915 = vmatpush1.msra.mxu0 %v878
      %916 = vmatprep.subr.mxu0 0.0
      %917 = vmatpush1.msra.mxu0 %v877
      %918 = vmatprep.subr.mxu0 0.0
      %919 = vmatpush1.msra.mxu0 %v876
      %920 = vmatprep.subr.mxu0 0.0
      %921 = vmatpush1.msra.mxu0 %v875
      %922 = vmatprep.subr.mxu0 0.0
      %923 = vmatpush1.msra.mxu0 %v874
      %924 = vmatprep.subr.mxu0 0.0
      %925 = vmatpush1.msra.mxu0 %v873
      %926 = vmatprep.subr.mxu0 0.0
      %927 = vmatpush1.msra.mxu0 %v872
      %928 = vmatprep.subr.mxu0 0.0
      %929 = vmatpush1.msra.mxu0 %v871
      %930 = vmatprep.subr.mxu0 0.0
      %931 = vmatpush1.msra.mxu0 %v870
      %932 = vmatprep.subr.mxu0 0.0
      %933 = vmatpush1.msra.mxu0 %v869
      %934 = vmatprep.subr.mxu0 0.0
      %935 = vmatpush1.msra.mxu0 %v868
      %936 = vmatprep.subr.mxu0 0.0
      %937 = vmatpush1.msra.mxu0 %v867
      %938 = vmatprep.subr.mxu0 0.0
      %939 = vmatpush1.msra.mxu0 %v866
      %940 = vmatprep.subr.mxu0 0.0
      %941 = vmatpush1.msra.mxu0 %v865
      %942 = vmatprep.subr.mxu0 0.0
      %943 = vmatpush1.msra.mxu0 %v864
      %944 = vmatprep.subr.mxu0 0.0
      %945 = vmatpush2.msra.mxu0 %v895
      %946 = vmatprep.subr.mxu0 0.0
      %947 = vmatpush2.msra.mxu0 %v894
      %948 = vmatprep.subr.mxu0 0.0
      %949 = vmatpush2.msra.mxu0 %v893
      %950 = vmatprep.subr.mxu0 0.0
      %951 = vmatpush2.msra.mxu0 %v892
      %952 = vmatprep.subr.mxu0 0.0
      %953 = vmatpush2.msra.mxu0 %v891
      %954 = vmatprep.subr.mxu0 0.0
      %955 = vmatpush2.msra.mxu0 %v890
      %956 = vmatprep.subr.mxu0 0.0
      %957 = vmatpush2.msra.mxu0 %v889
      %958 = vmatprep.subr.mxu0 0.0
      %959 = vmatpush2.msra.mxu0 %v888
      %960 = vmatprep.subr.mxu0 0.0
      %961 = vmatpush2.msra.mxu0 %v887
      %962 = vmatprep.subr.mxu0 0.0
      %963 = vmatpush2.msra.mxu0 %v886
      %964 = vmatprep.subr.mxu0 0.0
      %965 = vmatpush2.msra.mxu0 %v885
      %966 = vmatprep.subr.mxu0 0.0
      %967 = vmatpush2.msra.mxu0 %v884
      %968 = vmatprep.subr.mxu0 0.0
      %969 = vmatpush2.msra.mxu0 %v883
      %970 = vmatprep.subr.mxu0 0.0
      %971 = vmatpush2.msra.mxu0 %v882
      %972 = vmatprep.subr.mxu0 0.0
      %973 = vmatpush2.msra.mxu0 %v881
      %974 = vmatprep.subr.mxu0 0.0
      %975 = vmatpush2.msra.mxu0 %v880
      %976 = vmatprep.mubr.f32.mxu0 %v323
      %977 = vmatmul.mubr.f32.gmra.mxu0 %v322
      %v978 = vpop.f32.mrf.mxu0
      %v979 = vadd.f32 0.0, %v978
      %v980 = vpop.f32.mrf.mxu0
      %981 = vmatprep.mubr.f32.mxu0 %v326
      %982 = vmatmul.mubr.f32.gmra.mxu0 %v325
      %v983 = vpop.f32.mrf.mxu0
      %v984 = vadd.f32 0.0, %v983
      %v985 = vpop.f32.mrf.mxu0
      %986 = vmatprep.mubr.f32.mxu0 %v329
      %987 = vmatmul.mubr.f32.gmra.mxu0 %v328
      %v988 = vpop.f32.mrf.mxu0
      %v989 = vadd.f32 0.0, %v988
      %v990 = vpop.f32.mrf.mxu0
      %991 = vmatprep.mubr.f32.mxu0 %v332
      %992 = vmatmul.mubr.f32.gmra.mxu0 %v331
      %v993 = vpop.f32.mrf.mxu0
      %v994 = vadd.f32 0.0, %v993
      %v995 = vpop.f32.mrf.mxu0
      %996 = vmatprep.mubr.f32.mxu0 %v335
      %997 = vmatmul.mubr.f32.gmra.mxu0 %v334
      %v998 = vpop.f32.mrf.mxu0
      %v999 = vadd.f32 0.0, %v998
      %v1000 = vpop.f32.mrf.mxu0
      %1001 = vmatprep.mubr.f32.mxu0 %v338
      %1002 = vmatmul.mubr.f32.gmra.mxu0 %v337
      %v1003 = vpop.f32.mrf.mxu0
      %v1004 = vadd.f32 0.0, %v1003
      %v1005 = vpop.f32.mrf.mxu0
      %1006 = vmatprep.mubr.f32.mxu0 %v341
      %1007 = vmatmul.mubr.f32.gmra.mxu0 %v340
      %v1008 = vpop.f32.mrf.mxu0
      %v1009 = vadd.f32 0.0, %v1008
      %v1010 = vpop.f32.mrf.mxu0
      %1011 = vmatprep.mubr.f32.mxu0 %v344
      %1012 = vmatmul.mubr.f32.gmra.mxu0 %v343
      %v1013 = vpop.f32.mrf.mxu0
      %v1014 = vadd.f32 0.0, %v1013
      %v1015 = vpop.f32.mrf.mxu0
      %1016 = vdwg.mxu0
      %1017 = vmatprep.subr.mxu0 0.0
      %1018 = vmatpush1.msra.mxu0 %v911
      %1019 = vmatprep.subr.mxu0 0.0
      %1020 = vmatpush1.msra.mxu0 %v910
      %1021 = vmatprep.subr.mxu0 0.0
      %1022 = vmatpush1.msra.mxu0 %v909
      %1023 = vmatprep.subr.mxu0 0.0
      %1024 = vmatpush1.msra.mxu0 %v908
      %1025 = vmatprep.subr.mxu0 0.0
      %1026 = vmatpush1.msra.mxu0 %v907
      %1027 = vmatprep.subr.mxu0 0.0
      %1028 = vmatpush1.msra.mxu0 %v906
      %1029 = vmatprep.subr.mxu0 0.0
      %1030 = vmatpush1.msra.mxu0 %v905
      %1031 = vmatprep.subr.mxu0 0.0
      %1032 = vmatpush1.msra.mxu0 %v904
      %1033 = vmatprep.subr.mxu0 0.0
      %1034 = vmatpush1.msra.mxu0 %v903
      %1035 = vmatprep.subr.mxu0 0.0
      %1036 = vmatpush1.msra.mxu0 %v902
      %1037 = vmatprep.subr.mxu0 0.0
      %1038 = vmatpush1.msra.mxu0 %v901
      %1039 = vmatprep.subr.mxu0 0.0
      %1040 = vmatpush1.msra.mxu0 %v900
      %1041 = vmatprep.subr.mxu0 0.0
      %1042 = vmatpush1.msra.mxu0 %v899
      %1043 = vmatprep.subr.mxu0 0.0
      %1044 = vmatpush1.msra.mxu0 %v898
      %1045 = vmatprep.subr.mxu0 0.0
      %1046 = vmatpush1.msra.mxu0 %v897
      %1047 = vmatprep.subr.mxu0 0.0
      %1048 = vmatpush1.msra.mxu0 %v896
      %1049 = vmatprep.subr.mxu0 0.0
      %1050 = vmatpush2.msra.mxu0 0.0
      %1051 = vmatprep.subr.mxu0 0.0
      %1052 = vmatpush2.msra.mxu0 0.0
      %1053 = vmatprep.subr.mxu0 0.0
      %1054 = vmatpush2.msra.mxu0 0.0
      %1055 = vmatprep.subr.mxu0 0.0
      %1056 = vmatpush2.msra.mxu0 0.0
      %1057 = vmatprep.subr.mxu0 0.0
      %1058 = vmatpush2.msra.mxu0 0.0
      %1059 = vmatprep.subr.mxu0 0.0
      %1060 = vmatpush2.msra.mxu0 0.0
      %1061 = vmatprep.subr.mxu0 0.0
      %1062 = vmatpush2.msra.mxu0 0.0
      %1063 = vmatprep.subr.mxu0 0.0
      %1064 = vmatpush2.msra.mxu0 0.0
      %1065 = vmatprep.subr.mxu0 0.0
      %1066 = vmatpush2.msra.mxu0 0.0
      %1067 = vmatprep.subr.mxu0 0.0
      %1068 = vmatpush2.msra.mxu0 0.0
      %1069 = vmatprep.subr.mxu0 0.0
      %1070 = vmatpush2.msra.mxu0 0.0
      %1071 = vmatprep.subr.mxu0 0.0
      %1072 = vmatpush2.msra.mxu0 0.0
      %1073 = vmatprep.subr.mxu0 0.0
      %1074 = vmatpush2.msra.mxu0 0.0
      %1075 = vmatprep.subr.mxu0 0.0
      %1076 = vmatpush2.msra.mxu0 0.0
      %1077 = vmatprep.subr.mxu0 0.0
      %1078 = vmatpush2.msra.mxu0 0.0
      %1079 = vmatprep.subr.mxu0 0.0
      %1080 = vmatpush2.msra.mxu0 0.0
      %1081 = vmatprep.mubr.f32.mxu0 0.0
      %1082 = vmatmul.mubr.f32.gmra.mxu0 %v324
      %v1083 = vpop.f32.mrf.mxu0
      %v1084 = vadd.f32 %v979, %v1083
      %v1085 = vpop.f32.mrf.mxu0
      %1086 = vmatprep.mubr.f32.mxu0 0.0
      %1087 = vmatmul.mubr.f32.gmra.mxu0 %v327
      %v1088 = vpop.f32.mrf.mxu0
      %v1089 = vadd.f32 %v984, %v1088
      %v1090 = vpop.f32.mrf.mxu0
      %1091 = vmatprep.mubr.f32.mxu0 0.0
      %1092 = vmatmul.mubr.f32.gmra.mxu0 %v330
      %v1093 = vpop.f32.mrf.mxu0
      %v1094 = vadd.f32 %v989, %v1093
      %v1095 = vpop.f32.mrf.mxu0
      %1096 = vmatprep.mubr.f32.mxu0 0.0
      %1097 = vmatmul.mubr.f32.gmra.mxu0 %v333
      %v1098 = vpop.f32.mrf.mxu0
      %v1099 = vadd.f32 %v994, %v1098
      %v1100 = vpop.f32.mrf.mxu0
      %1101 = vmatprep.mubr.f32.mxu0 0.0
      %1102 = vmatmul.mubr.f32.gmra.mxu0 %v336
      %v1103 = vpop.f32.mrf.mxu0
      %v1104 = vadd.f32 %v999, %v1103
      %v1105 = vpop.f32.mrf.mxu0
      %1106 = vmatprep.mubr.f32.mxu0 0.0
      %1107 = vmatmul.mubr.f32.gmra.mxu0 %v339
      %v1108 = vpop.f32.mrf.mxu0
      %v1109 = vadd.f32 %v1004, %v1108
      %v1110 = vpop.f32.mrf.mxu0
      %1111 = vmatprep.mubr.f32.mxu0 0.0
      %1112 = vmatmul.mubr.f32.gmra.mxu0 %v342
      %v1113 = vpop.f32.mrf.mxu0
      %v1114 = vadd.f32 %v1009, %v1113
      %v1115 = vpop.f32.mrf.mxu0
      %1116 = vmatprep.mubr.f32.mxu0 0.0
      %1117 = vmatmul.mubr.f32.gmra.mxu0 %v345
      %v1118 = vpop.f32.mrf.mxu0
      %v1119 = vadd.f32 %v1014, %v1118
      %v1120 = vpop.f32.mrf.mxu0
      %1121 = vdwg.mxu0
      %v1122 = vadd.f32 %v825, %v1084
      %v1123 = vadd.f32 %v830, %v1089
      %v1124 = vadd.f32 %v835, %v1094
      %v1125 = vadd.f32 %v840, %v1099
      %v1126 = vadd.f32 %v845, %v1104
      %v1127 = vadd.f32 %v850, %v1109
      %v1128 = vadd.f32 %v855, %v1114
      %v1129 = vadd.f32 %v860, %v1119
      %1130 = vst [vmem:[%s251] sm:$0xff] %v1122
      %1131 = vst [vmem:[%s251 + $0x8] sm:$0xff] %v1123
      %1132 = vst [vmem:[%s251 + $0x10] sm:$0xff] %v1124
      %1133 = vst [vmem:[%s251 + $0x18] sm:$0xff] %v1125
      %1134 = vst [vmem:[%s251 + $0x20] sm:$0xff] %v1126
      %1135 = vst [vmem:[%s251 + $0x28] sm:$0xff] %v1127
      %1136 = vst [vmem:[%s251 + $0x30] sm:$0xff] %v1128
      %1137 = vst [vmem:[%s251 + $0x38] sm:$0xff] %v1129
      %v1138 = vadd.f32 %v1122, %v1123
      %v1139 = vadd.f32 %v1138, %v1124
      %v1140 = vadd.f32 %v1139, %v1125
      %v1141 = vadd.f32 %v1140, %v1126
      %v1142 = vadd.f32 %v1141, %v1127
      %v1143 = vadd.f32 %v1142, %v1128
      %v1144 = vadd.f32 %v1143, %v1129
      %v1145 = vrot.slane %v1144, 4
      %v1146 = vadd.f32 %v1144, %v1145
      %v1147 = vrot.slane %v1146, 2
      %v1148 = vadd.f32 %v1146, %v1147
      %v1149 = vrot.slane %v1148, 1
      %v1150 = vadd.f32 %v1148, %v1149
      %v1151 = vmul.f32 %v1122, %v1122
      %v1152 = vmul.f32 %v1123, %v1123
      %v1153 = vmul.f32 %v1124, %v1124
      %v1154 = vmul.f32 %v1125, %v1125
      %v1155 = vmul.f32 %v1126, %v1126
      %v1156 = vmul.f32 %v1127, %v1127
      %v1157 = vmul.f32 %v1128, %v1128
      %v1158 = vmul.f32 %v1129, %v1129
      %v1159 = vadd.f32 %v1151, %v1152
      %v1160 = vadd.f32 %v1159, %v1153
      %v1161 = vadd.f32 %v1160, %v1154
      %v1162 = vadd.f32 %v1161, %v1155
      %v1163 = vadd.f32 %v1162, %v1156
      %v1164 = vadd.f32 %v1163, %v1157
      %v1165 = vadd.f32 %v1164, %v1158
      %v1166 = vrot.slane %v1165, 4
      %v1167 = vadd.f32 %v1165, %v1166
      %v1168 = vrot.slane %v1167, 2
      %v1169 = vadd.f32 %v1167, %v1168
      %v1170 = vrot.slane %v1169, 1
      %v1171 = vadd.f32 %v1169, %v1170
      %vm1172 = vcmask 1040384
      %v1173 = vsel %vm1172, %v1150, %v1171
      %1174 = vst [vmem:[%s259] sm:$0x3] %v1173
      %s1175 = smul.u32 8, %s21
      %p1176 = scmp.lt.s32.totalorder %s20, 1
      %s1177 = scalar_select %p1176, %s20, 1
      %p1178 = scmp.lt.s32.totalorder %s1175, 7
      %s1179 = scalar_select %p1178, %s1175, 7
      %s1180 = smul.addr %s1177, 8
      %s1181 = sadd.s32 %s1179, %s1180
      %s1182 = smul.addr %s1181, 8
      %s1183 = scalar_lea.vmem %s3, %s1182
      %p1184 = scmp.lt.s32.totalorder %s20, 1
      %s1185 = scalar_select %p1184, %s20, 1
      %p1186 = scmp.lt.s32.totalorder %s21, 0
      %s1187 = scalar_select %p1186, %s21, 0
      %s1188 = sadd.s32 %s1187, %s1185
      %s1189 = smul.addr %s1188, 2
      %s1190 = scalar_lea.vmem %s4, %s1189
      // Predicated region
      $region33: #{conv_bn.2} parent=31 // pred_check
        %p1191 = pneg %p121
      $region34: #{conv_bn.2} parent=31 // pred_check_branch
        %1193 = sbr.rel (%p1191) target = $region36
      $region35: #{conv_bn.2} parent=31 // pred_region
        %s1194 = smul.u32 8, %s21
      $region36: #{conv_bn.2} parent=31 // pred_fallthru
        _
      // Predicated region
      $region37: #{conv_bn.2} parent=31 // pred_check
        %p1195 = pneg %p149
      $region38: #{conv_bn.2} parent=31 // pred_check_branch
        %1197 = sbr.rel (%p1195) target = $region40
      $region39: #{conv_bn.2} parent=31 // pred_region
        _
      $region40: #{conv_bn.2} parent=31 // pred_fallthru
        _
    $region32: #{conv_bn.2} parent=5 // pred_fallthru
      _
    %p1198 = scmp.le.s32.totalorder 2, %s11
    // Predicated region
    $region41: #{conv_bn.2} parent=5 // pred_check
      %p1199 = pneg %p1198
    $region42: #{conv_bn.2} parent=5 // pred_check_branch
      %1201 = sbr.rel (%p1199) target = $region44
    $region43: #{conv_bn.2} parent=5 // pred_region
      %s1202 = ssub.s32 %s11, 2
      // Predicated region
      $region45: #{conv_bn.2} parent=43 // pred_check
        %p1203 = pneg %p127
      $region46: #{conv_bn.2} parent=43 // pred_check_branch
        %1205 = sbr.rel (%p1203) target = $region48
      $region47: #{conv_bn.2} parent=43 // pred_region
        %s1206 = smul.u32 8, %s23
        %p1207 = scmp.lt.s32.totalorder %s22, 1
        %s1208 = scalar_select %p1207, %s22, 1
        %p1209 = scmp.lt.s32.totalorder %s1206, 7
        %s1210 = scalar_select %p1209, %s1206, 7
        %s1211 = smul.addr %s1208, 8
        %s1212 = sadd.s32 %s1210, %s1211
        %s1213 = smul.addr %s1212, 8
        %s1214 = scalar_lea.vmem %s3, %s1213
      $region48: #{conv_bn.2} parent=43 // pred_fallthru
        _
      // Predicated region
      $region49: #{conv_bn.2} parent=43 // pred_check
        %p1215 = pneg %p155
      $region50: #{conv_bn.2} parent=43 // pred_check_branch
        %1217 = sbr.rel (%p1215) target = $region52
      $region51: #{conv_bn.2} parent=43 // pred_region
        %p1218 = scmp.lt.s32.totalorder %s22, 1
        %s1219 = scalar_select %p1218, %s22, 1
        %p1220 = scmp.lt.s32.totalorder %s23, 0
        %s1221 = scalar_select %p1220, %s23, 0
        %s1222 = sadd.s32 %s1221, %s1219
        %s1223 = smul.addr %s1222, 2
        %s1224 = scalar_lea.vmem %s4, %s1223
      $region52: #{conv_bn.2} parent=43 // pred_fallthru
        _
    $region44: #{conv_bn.2} parent=5 // pred_fallthru
      _
  $region6: #{conv_bn.2} parent=0 // loop_footer
    %s15 = sadd.s32 1, %s11
  $region7: #{conv_bn.2} parent=0 // loop_footer_branch
    %10 = sbr.rel target = $region3
  $region8: #{conv_bn.2} parent=0 // loop_exit
    _

</llo_original>
